<compile_context>
chip_gen: v5e
topology: v5e:2x2
jax: 0.10.0
libtpu: 0.0.40
codegen_flags: <defaults>
</compile_context>

<pallas_src>
import functools

import jax
import jax.numpy as jnp
from jax.experimental import pallas as pl
from jax.experimental.pallas import tpu as pltpu


def _round_up(x, m):
    return ((x + m - 1) // m) * m


def _pad_gate_cols(w, H, Hp):
    """(K, 4*H) -> (K, 4*Hp): each gate's H columns placed at a Hp-aligned offset."""
    K = w.shape[0]
    w4 = w.reshape(K, 4, H)
    w4 = jnp.pad(w4, ((0, 0), (0, 0), (0, Hp - H)))
    return w4.reshape(K, 4 * Hp)


def _decoder_kernel(zf_ref, cond_ref, h0_ref, c0_ref,
                    w_ih_z_ref, w_ih_c_ref, w_hh_ref, b_ref,
                    fc_w_ref, fc_b_ref,
                    y_ref, hn_ref, cn_ref,
                    gx_sc, hseq_sc, bias_sc, h_sc, c_sc,
                    *, T, Tc, Bp, Hp, needs_mask, unroll):
    """One grid step = one chunk of Tc timesteps.

    zf_ref:   (Tc*Bp, Lp)  bf16, time-major, batch-padded latents for this chunk
    cond_ref: (Bp, Cp)     bf16 conditioning (time-invariant)
    h0/c0:    (Bp, Hp)     f32 initial recurrent state (gate/H padded with zeros;
                           padded lanes stay exactly zero only because of that)
    weights pre-transposed for x @ W, gate order i,f,g,o (PyTorch convention),
    bf16; biases f32.
    """
    chunk = pl.program_id(0)
    chunk_base = chunk * Tc

    # ---- Once, at the first chunk: initial state + time-invariant bias.
    @pl.when(chunk == 0)
    def _():
        h_sc[...] = h0_ref[...]
        c_sc[...] = c0_ref[...]
        bias_sc[...] = (jnp.dot(cond_ref[...], w_ih_c_ref[...],
                                preferred_element_type=jnp.float32)
                        + b_ref[...])                              # (Bp, 4Hp) f32

    # ---- Per-chunk prologue: batched input projection for the whole chunk,
    # with the (time-invariant) effective bias folded in here, off the serial path.
    gx = jnp.dot(zf_ref[...], w_ih_z_ref[...],
                 preferred_element_type=jnp.float32)               # (Tc*Bp, 4Hp)
    gx_sc[...] = gx + jnp.tile(bias_sc[...], (Tc, 1))

    # ---- Serial recurrence: only h_prev @ W_hh + elementwise gates per step.
    def step(t, carry):
        row = pl.multiple_of(t * Bp, Bp)          # Bp multiple of 16 -> aligned
        gates = gx_sc[pl.ds(row, Bp), :] + jnp.dot(
            h_sc[...].astype(jnp.bfloat16), w_hh_ref[...],
            preferred_element_type=jnp.float32)                    # (Bp, 4Hp) f32
        # Gate slices are full 128-lane tiles because H is padded to Hp.
        i_g = jax.nn.sigmoid(gates[:, 0 * Hp:1 * Hp])
        f_g = jax.nn.sigmoid(gates[:, 1 * Hp:2 * Hp])
        g_g = jnp.tanh(gates[:, 2 * Hp:3 * Hp])
        o_g = jax.nn.sigmoid(gates[:, 3 * Hp:4 * Hp])
        c_new = f_g * c_sc[...] + i_g * g_g
        h_new = o_g * jnp.tanh(c_new)
        # h for the deferred fc is staged in bf16 (rows past T are sliced away
        # by the wrapper; h is bounded so they are finite).
        hseq_sc[pl.ds(row, Bp), :] = h_new.astype(jnp.bfloat16)
        if needs_mask:
            # Tail chunk: only advance the carry for real timesteps so that
            # h_n / c_n reflect the state after timestep T-1.
            @pl.when(chunk_base + t < T)
            def _():
                h_sc[...] = h_new
                c_sc[...] = c_new
        else:
            h_sc[...] = h_new
            c_sc[...] = c_new
        return carry

    jax.lax.fori_loop(0, Tc, step, 0, unroll=unroll)

    # ---- Per-chunk epilogue: deferred fc as one batched bf16 matmul,
    # single lane-dense store of this chunk's output rows.
    y_ref[...] = (jnp.dot(hseq_sc[...], fc_w_ref[...],
                          preferred_element_type=jnp.float32)
                  + fc_b_ref[...]).astype(y_ref.dtype)
    hn_ref[...] = h_sc[...]
    cn_ref[...] = c_sc[...]


def decoder_forward(z, cond, hidden, params, *, chunk_steps=None):
    """JAX/Pallas equivalent of Decoder.forward.

    z:      (B, T, latent_dim)   float32
    cond:   (B, cond_dim)        float32
    hidden: tuple (h0, c0), each (1, B, hidden_dim)  -- PyTorch LSTM convention
    params: dict with w_ih (latent+cond, 4H), w_hh (H, 4H), b (1, 4H),
            fc_w (H, out), fc_b (1, out)
    """
    B, T, L = z.shape
    C = cond.shape[-1]
    H = params["w_hh"].shape[0]
    out_dim = params["fc_w"].shape[1]

    Bp = _round_up(B, 16)         # 16 so bf16 sublane packing stays tile-aligned
    Hp = _round_up(H, 128)        # 128-lane-aligned gates / hidden state
    Op = _round_up(out_dim, 128)  # lane-dense output store
    Lp = _round_up(L, 8)
    Cp = _round_up(C, 8)

    if chunk_steps is None:
        chunk_steps = 32
    Tc = max(1, min(int(chunk_steps), T))
    n_chunks = -(-T // Tc)
    Tpad = n_chunks * Tc
    needs_mask = (Tpad != T)
    unroll = max(1, min(Tc, 4))

    # --- pad + bf16-cast parameters (a real model would store them this way).
    w_ih = params["w_ih"]
    w_ih_z = jnp.pad(_pad_gate_cols(w_ih[:L], H, Hp),
                     ((0, Lp - L), (0, 0))).astype(jnp.bfloat16)       # (Lp, 4Hp)
    w_ih_c = jnp.pad(_pad_gate_cols(w_ih[L:], H, Hp),
                     ((0, Cp - C), (0, 0))).astype(jnp.bfloat16)       # (Cp, 4Hp)
    w_hh_p = jnp.pad(_pad_gate_cols(params["w_hh"], H, Hp),
                     ((0, Hp - H), (0, 0))).astype(jnp.bfloat16)       # (Hp, 4Hp)
    b_p = _pad_gate_cols(params["b"], H, Hp)                           # (1, 4Hp) f32
    fc_w_p = jnp.pad(params["fc_w"],
                     ((0, Hp - H), (0, Op - out_dim))).astype(jnp.bfloat16)
    fc_b_p = jnp.pad(params["fc_b"], ((0, 0), (0, Op - out_dim)))      # (1, Op) f32

    # --- glue: time-major, batch/time padded, flattened latents + padded states.
    z_tm = jnp.transpose(z, (1, 0, 2))                                 # (T, B, L)
    z_tm = jnp.pad(z_tm, ((0, Tpad - T), (0, Bp - B), (0, Lp - L)))
    zf = z_tm.reshape(Tpad * Bp, Lp).astype(jnp.bfloat16)
    cond_p = jnp.pad(cond, ((0, Bp - B), (0, Cp - C))).astype(jnp.bfloat16)
    # NOTE: padded hidden lanes stay zero only because h0/c0 are zero-padded here.
    h0 = jnp.pad(hidden[0][0], ((0, Bp - B), (0, Hp - H)))
    c0 = jnp.pad(hidden[1][0], ((0, Bp - B), (0, Hp - H)))

    const2d = lambda shape: pl.BlockSpec(shape, lambda i: (0, 0))

    # Scoped-VMEM budget: chunking bounds usage to O(Tc); raise v5e's 16 MiB
    # default, stay well under v7x's 64 MiB physical ceiling.
    vmem_limit_bytes = 32 * 1024 * 1024

    kernel = pl.pallas_call(
        functools.partial(_decoder_kernel, T=T, Tc=Tc, Bp=Bp, Hp=Hp,
                          needs_mask=needs_mask, unroll=unroll),
        out_shape=(
            jax.ShapeDtypeStruct((Tpad * Bp, Op), jnp.float32),   # y (time-major)
            jax.ShapeDtypeStruct((Bp, Hp), jnp.float32),          # h_n
            jax.ShapeDtypeStruct((Bp, Hp), jnp.float32),          # c_n
        ),
        grid_spec=pltpu.PrefetchScalarGridSpec(
            num_scalar_prefetch=0,
            grid=(n_chunks,),
            in_specs=[
                pl.BlockSpec((Tc * Bp, Lp), lambda i: (i, 0)),    # zf (per chunk)
                const2d((Bp, Cp)),          # cond
                const2d((Bp, Hp)),          # h0
                const2d((Bp, Hp)),          # c0
                const2d((Lp, 4 * Hp)),      # w_ih (latent part)
                const2d((Cp, 4 * Hp)),      # w_ih (cond part)
                const2d((Hp, 4 * Hp)),      # w_hh
                const2d((1, 4 * Hp)),       # b (b_ih + b_hh)
                const2d((Hp, Op)),          # fc_w
                const2d((1, Op)),           # fc_b
            ],
            out_specs=[
                pl.BlockSpec((Tc * Bp, Op), lambda i: (i, 0)),    # y (per chunk)
                const2d((Bp, Hp)),          # h_n
                const2d((Bp, Hp)),          # c_n
            ],
            scratch_shapes=[
                pltpu.VMEM((Tc * Bp, 4 * Hp), jnp.float32),   # gx (chunk)
                pltpu.VMEM((Tc * Bp, Hp), jnp.bfloat16),      # h sequence staging
                pltpu.VMEM((Bp, 4 * Hp), jnp.float32),        # cached effective bias
                pltpu.VMEM((Bp, Hp), jnp.float32),            # h carry
                pltpu.VMEM((Bp, Hp), jnp.float32),            # c carry
            ],
        ),
        compiler_params=pltpu.CompilerParams(
            dimension_semantics=("arbitrary",),
            vmem_limit_bytes=vmem_limit_bytes),
    )

    y_flat, hn_p, cn_p = kernel(zf, cond_p, h0, c0,
                                w_ih_z, w_ih_c, w_hh_p, b_p, fc_w_p, fc_b_p)

    y = y_flat.reshape(Tpad, Bp, Op)[:T, :B, :out_dim]                 # (T, B, out)
    x_recon = jnp.transpose(y, (1, 0, 2))                              # (B, T, out)
    if x_recon.shape[1] == 1:                                          # torch .squeeze(1)
        x_recon = jnp.squeeze(x_recon, axis=1)
    h_n = hn_p[:B, :H][None, ...]
    c_n = cn_p[:B, :H][None, ...]
    return x_recon, (h_n, c_n)


def _reference_forward(z, cond, hidden, params):
    """Pure-JAX reference (lax.scan) mirroring PyTorch LSTM + Linear."""
    B, T, _ = z.shape
    H = params["w_hh"].shape[0]
    cond_rep = jnp.broadcast_to(cond[:, None, :], (B, T, cond.shape[-1]))
    x = jnp.concatenate([z, cond_rep], axis=-1)
    x_tm = jnp.transpose(x, (1, 0, 2))

    def step(carry, x_t):
        h, c = carry
        gates = x_t @ params["w_ih"] + h @ params["w_hh"] + params["b"]
        i = jax.nn.sigmoid(gates[:, 0 * H:1 * H])
        f = jax.nn.sigmoid(gates[:, 1 * H:2 * H])
        g = jnp.tanh(gates[:, 2 * H:3 * H])
        o = jax.nn.sigmoid(gates[:, 3 * H:4 * H])
        c_new = f * c + i * g
        h_new = o * jnp.tanh(c_new)
        y = h_new @ params["fc_w"] + params["fc_b"]
        return (h_new, c_new), y

    (h_n, c_n), y_tm = jax.lax.scan(step, (hidden[0][0], hidden[1][0]), x_tm)
    x_recon = jnp.transpose(y_tm, (1, 0, 2))
    if x_recon.shape[1] == 1:
        x_recon = jnp.squeeze(x_recon, axis=1)
    return x_recon, (h_n[None], c_n[None])


def init_params(key, latent_dim, hidden_dim, output_dim, cond_dim):
    """Deterministic synthetic parameters with PyTorch LSTM/Linear shapes
    (stored pre-transposed for x @ W usage; gate order i,f,g,o as in torch)."""
    D_in = latent_dim + cond_dim
    ks = jax.random.split(key, 6)
    s = 1.0 / jnp.sqrt(hidden_dim)
    w_ih = jax.random.uniform(ks[0], (D_in, 4 * hidden_dim), jnp.float32, -s, s)
    w_hh = jax.random.uniform(ks[1], (hidden_dim, 4 * hidden_dim), jnp.float32, -s, s)
    b_ih = jax.random.uniform(ks[2], (4 * hidden_dim,), jnp.float32, -s, s)
    b_hh = jax.random.uniform(ks[3], (4 * hidden_dim,), jnp.float32, -s, s)
    fc_w = jax.random.uniform(ks[4], (hidden_dim, output_dim), jnp.float32, -s, s)
    fc_b = jax.random.uniform(ks[5], (output_dim,), jnp.float32, -s, s)
    return {
        "w_ih": w_ih,
        "w_hh": w_hh,
        "b": (b_ih + b_hh)[None, :],     # (1, 4H)
        "fc_w": fc_w,
        "fc_b": fc_b[None, :],           # (1, out)
    }


if __name__ == "__main__":
    B, T = 2, 8
    latent_dim, hidden_dim, output_dim, cond_dim = 8, 32, 16, 4

    key = jax.random.PRNGKey(0)
    k_z, k_c, k_h, k_cc, k_p = jax.random.split(key, 5)

    z = jax.random.normal(k_z, (B, T, latent_dim), jnp.float32)
    cond = jax.random.normal(k_c, (B, cond_dim), jnp.float32)
    h0 = jax.random.normal(k_h, (1, B, hidden_dim), jnp.float32)
    c0 = jax.random.normal(k_cc, (1, B, hidden_dim), jnp.float32)
    params = init_params(k_p, latent_dim, hidden_dim, output_dim, cond_dim)

    # chunk_steps=3 forces multiple grid chunks + a masked tail (8 = 3+3+2),
    # exercising the carry-across-grid and tail-masking paths.
    x_recon, (h_n, c_n) = decoder_forward(z, cond, (h0, c0), params, chunk_steps=3)
    jax.block_until_ready((x_recon, h_n, c_n))

    # Sanity check against a pure-JAX f32 reference.  Tolerances are loosened
    # because the kernel feeds the MXU bf16 inputs (f32 accumulation).
    x_ref, (h_ref, c_ref) = _reference_forward(z, cond, (h0, c0), params)
    assert jnp.allclose(x_recon, x_ref, atol=5e-2, rtol=5e-2)
    assert jnp.allclose(h_n, h_ref, atol=5e-2, rtol=5e-2)
    assert jnp.allclose(c_n, c_ref, atol=5e-2, rtol=5e-2)

    print("KERNEL_OK")
</pallas_src>

<mosaic_0001>
module attributes {stable_mosaic.version = 11 : i64} {
  func.func @_decoder_kernel(%arg0: i32, %arg1: memref<48x8xbf16, #tpu.memory_space<vmem>>, %arg2: memref<16x8xbf16, #tpu.memory_space<vmem>>, %arg3: memref<16x128xf32, #tpu.memory_space<vmem>>, %arg4: memref<16x128xf32, #tpu.memory_space<vmem>>, %arg5: memref<8x512xbf16, #tpu.memory_space<vmem>>, %arg6: memref<8x512xbf16, #tpu.memory_space<vmem>>, %arg7: memref<128x512xbf16, #tpu.memory_space<vmem>>, %arg8: memref<1x512xf32, #tpu.memory_space<vmem>>, %arg9: memref<128x128xbf16, #tpu.memory_space<vmem>>, %arg10: memref<1x128xf32, #tpu.memory_space<vmem>>, %arg11: memref<48x128xf32, #tpu.memory_space<vmem>>, %arg12: memref<16x128xf32, #tpu.memory_space<vmem>>, %arg13: memref<16x128xf32, #tpu.memory_space<vmem>>, %arg14: memref<48x512xf32, #tpu.memory_space<vmem>>, %arg15: memref<48x128xbf16, #tpu.memory_space<vmem>>, %arg16: memref<16x512xf32, #tpu.memory_space<vmem>>, %arg17: memref<16x128xf32, #tpu.memory_space<vmem>>, %arg18: memref<16x128xf32, #tpu.memory_space<vmem>>) attributes {dimension_semantics = [#tpu.dimension_semantics<arbitrary>], iteration_bounds = array<i64: 3>, scalar_prefetch = 0 : i64, scratch_operands = 5 : i64, tpu.core_type = #tpu.core_type<tc>, window_params = [{transform_indices = @transform_0, window_bounds = array<i64: 48, 8>}, {pipeline_mode = #tpu.pipeline_mode<synchronous>, transform_indices = @transform_1, window_bounds = array<i64: 16, 8>}, {pipeline_mode = #tpu.pipeline_mode<synchronous>, transform_indices = @transform_2, window_bounds = array<i64: 16, 128>}, {pipeline_mode = #tpu.pipeline_mode<synchronous>, transform_indices = @transform_3, window_bounds = array<i64: 16, 128>}, {pipeline_mode = #tpu.pipeline_mode<synchronous>, transform_indices = @transform_4, window_bounds = array<i64: 8, 512>}, {pipeline_mode = #tpu.pipeline_mode<synchronous>, transform_indices = @transform_5, window_bounds = array<i64: 8, 512>}, {pipeline_mode = #tpu.pipeline_mode<synchronous>, transform_indices = @transform_6, window_bounds = array<i64: 128, 512>}, {pipeline_mode = #tpu.pipeline_mode<synchronous>, transform_indices = @transform_7, window_bounds = array<i64: 1, 512>}, {pipeline_mode = #tpu.pipeline_mode<synchronous>, transform_indices = @transform_8, window_bounds = array<i64: 128, 128>}, {pipeline_mode = #tpu.pipeline_mode<synchronous>, transform_indices = @transform_9, window_bounds = array<i64: 1, 128>}, {transform_indices = @transform_10, window_bounds = array<i64: 48, 128>}, {pipeline_mode = #tpu.pipeline_mode<synchronous>, transform_indices = @transform_11, window_bounds = array<i64: 16, 128>}, {pipeline_mode = #tpu.pipeline_mode<synchronous>, transform_indices = @transform_12, window_bounds = array<i64: 16, 128>}]} {
    %c3_i32 = arith.constant 3 : i32
    %0 = arith.muli %arg0, %c3_i32 : i32
    %c0_i32 = arith.constant 0 : i32
    %1 = arith.cmpi eq, %arg0, %c0_i32 : i32
    %2 = arith.extui %1 : i1 to i32
    %c0_i32_0 = arith.constant 0 : i32
    %3 = arith.cmpi ne, %2, %c0_i32_0 : i32
    scf.if %3 {
      %c0_70 = arith.constant 0 : index
      %c0_71 = arith.constant 0 : index
      %148 = vector.load %arg3[%c0_70, %c0_71] : memref<16x128xf32, #tpu.memory_space<vmem>>, vector<16x128xf32>
      %c0_72 = arith.constant 0 : index
      %c0_73 = arith.constant 0 : index
      %149 = vector.load %arg17[%c0_72, %c0_73] : memref<16x128xf32, #tpu.memory_space<vmem>>, vector<16x128xf32>
      tpu.vector_store %arg17[%c0_72, %c0_73], %148 {strides = array<i32>} : memref<16x128xf32, #tpu.memory_space<vmem>>, vector<16x128xf32>,
      %c0_74 = arith.constant 0 : index
      %c0_75 = arith.constant 0 : index
      %150 = vector.load %arg4[%c0_74, %c0_75] : memref<16x128xf32, #tpu.memory_space<vmem>>, vector<16x128xf32>
      %c0_76 = arith.constant 0 : index
      %c0_77 = arith.constant 0 : index
      %151 = vector.load %arg18[%c0_76, %c0_77] : memref<16x128xf32, #tpu.memory_space<vmem>>, vector<16x128xf32>
      tpu.vector_store %arg18[%c0_76, %c0_77], %150 {strides = array<i32>} : memref<16x128xf32, #tpu.memory_space<vmem>>, vector<16x128xf32>,
      %c0_78 = arith.constant 0 : index
      %c0_79 = arith.constant 0 : index
      %152 = vector.load %arg2[%c0_78, %c0_79] : memref<16x8xbf16, #tpu.memory_space<vmem>>, vector<16x8xbf16>
      %c0_80 = arith.constant 0 : index
      %c0_81 = arith.constant 0 : index
      %153 = vector.load %arg6[%c0_80, %c0_81] : memref<8x512xbf16, #tpu.memory_space<vmem>>, vector<8x512xbf16>
      %cst_82 = arith.constant dense<0.000000e+00> : vector<16x512xf32>
      %154 = tpu.matmul %152, %153, %cst_82 {dimension_numbers = #tpu.dot_dimension_numbers<[1], [0], [0], [1], [0, 0, 1, 1], [], []>} : vector<16x8xbf16>, vector<8x512xbf16>, vector<16x512xf32> -> vector<16x512xf32>
      %c0_83 = arith.constant 0 : index
      %c0_84 = arith.constant 0 : index
      %155 = vector.load %arg8[%c0_83, %c0_84] : memref<1x512xf32, #tpu.memory_space<vmem>>, vector<1x512xf32>
      %156 = vector.broadcast %155 : vector<1x512xf32> to vector<16x512xf32>
      %157 = arith.addf %154, %156 : vector<16x512xf32>
      %c0_85 = arith.constant 0 : index
      %c0_86 = arith.constant 0 : index
      %158 = vector.load %arg16[%c0_85, %c0_86] : memref<16x512xf32, #tpu.memory_space<vmem>>, vector<16x512xf32>
      tpu.vector_store %arg16[%c0_85, %c0_86], %157 {strides = array<i32>} : memref<16x512xf32, #tpu.memory_space<vmem>>, vector<16x512xf32>,
    } else {
    }
    %c0 = arith.constant 0 : index
    %c0_1 = arith.constant 0 : index
    %4 = vector.load %arg1[%c0, %c0_1] : memref<48x8xbf16, #tpu.memory_space<vmem>>, vector<48x8xbf16>
    %c0_2 = arith.constant 0 : index
    %c0_3 = arith.constant 0 : index
    %5 = vector.load %arg5[%c0_2, %c0_3] : memref<8x512xbf16, #tpu.memory_space<vmem>>, vector<8x512xbf16>
    %cst = arith.constant dense<0.000000e+00> : vector<48x512xf32>
    %6 = tpu.matmul %4, %5, %cst {dimension_numbers = #tpu.dot_dimension_numbers<[1], [0], [0], [1], [0, 0, 1, 1], [], []>} : vector<48x8xbf16>, vector<8x512xbf16>, vector<48x512xf32> -> vector<48x512xf32>
    %c0_4 = arith.constant 0 : index
    %c0_5 = arith.constant 0 : index
    %7 = vector.load %arg16[%c0_4, %c0_5] : memref<16x512xf32, #tpu.memory_space<vmem>>, vector<16x512xf32>
    %8 = tpu.concatenate %7, %7, %7 in 0 : vector<16x512xf32>, vector<16x512xf32>, vector<16x512xf32> -> vector<48x512xf32>
    %9 = arith.addf %6, %8 : vector<48x512xf32>
    %c0_6 = arith.constant 0 : index
    %c0_7 = arith.constant 0 : index
    %10 = vector.load %arg14[%c0_6, %c0_7] : memref<48x512xf32, #tpu.memory_space<vmem>>, vector<48x512xf32>
    tpu.vector_store %arg14[%c0_6, %c0_7], %9 {strides = array<i32>} : memref<48x512xf32, #tpu.memory_space<vmem>>, vector<48x512xf32>,
    %c0_i32_8 = arith.constant 0 : i32
    %c16_i32 = arith.constant 16 : i32
    %11 = arith.muli %c0_i32_8, %c16_i32 : i32
    %12 = tpu.assume_multiple %11, 16 : i32
    %13 = arith.index_cast %12 : i32 to index
    %c0_9 = arith.constant 0 : index
    %14 = vector.load %arg14[%13, %c0_9] : memref<48x512xf32, #tpu.memory_space<vmem>>, vector<16x512xf32>
    %c0_10 = arith.constant 0 : index
    %c0_11 = arith.constant 0 : index
    %15 = vector.load %arg17[%c0_10, %c0_11] : memref<16x128xf32, #tpu.memory_space<vmem>>, vector<16x128xf32>
    %16 = arith.truncf %15 : vector<16x128xf32> to vector<16x128xbf16>
    %c0_12 = arith.constant 0 : index
    %c0_13 = arith.constant 0 : index
    %17 = vector.load %arg7[%c0_12, %c0_13] : memref<128x512xbf16, #tpu.memory_space<vmem>>, vector<128x512xbf16>
    %cst_14 = arith.constant dense<0.000000e+00> : vector<16x512xf32>
    %18 = tpu.matmul %16, %17, %cst_14 {dimension_numbers = #tpu.dot_dimension_numbers<[1], [0], [0], [1], [0, 0, 1, 1], [], []>} : vector<16x128xbf16>, vector<128x512xbf16>, vector<16x512xf32> -> vector<16x512xf32>
    %19 = arith.addf %14, %18 : vector<16x512xf32>
    %20 = vector.extract_strided_slice %19 {offsets = [0, 0], sizes = [16, 128], strides = [1, 1]} : vector<16x512xf32> to vector<16x128xf32>
    %21 = arith.negf %20 : vector<16x128xf32>
    %22 = math.exp %21 : vector<16x128xf32>
    %cst_15 = arith.constant 1.000000e+00 : f32
    %23 = vector.broadcast %cst_15 : f32 to vector<16x128xf32>
    %24 = arith.addf %23, %22 : vector<16x128xf32>
    %25 = arith.divf %23, %24 : vector<16x128xf32>
    %26 = vector.extract_strided_slice %19 {offsets = [0, 128], sizes = [16, 128], strides = [1, 1]} : vector<16x512xf32> to vector<16x128xf32>
    %27 = arith.negf %26 : vector<16x128xf32>
    %28 = math.exp %27 : vector<16x128xf32>
    %cst_16 = arith.constant 1.000000e+00 : f32
    %29 = vector.broadcast %cst_16 : f32 to vector<16x128xf32>
    %30 = arith.addf %29, %28 : vector<16x128xf32>
    %31 = arith.divf %29, %30 : vector<16x128xf32>
    %32 = vector.extract_strided_slice %19 {offsets = [0, 256], sizes = [16, 128], strides = [1, 1]} : vector<16x512xf32> to vector<16x128xf32>
    %33 = math.tanh %32 : vector<16x128xf32>
    %34 = vector.extract_strided_slice %19 {offsets = [0, 384], sizes = [16, 128], strides = [1, 1]} : vector<16x512xf32> to vector<16x128xf32>
    %35 = arith.negf %34 : vector<16x128xf32>
    %36 = math.exp %35 : vector<16x128xf32>
    %cst_17 = arith.constant 1.000000e+00 : f32
    %37 = vector.broadcast %cst_17 : f32 to vector<16x128xf32>
    %38 = arith.addf %37, %36 : vector<16x128xf32>
    %39 = arith.divf %37, %38 : vector<16x128xf32>
    %c0_18 = arith.constant 0 : index
    %c0_19 = arith.constant 0 : index
    %40 = vector.load %arg18[%c0_18, %c0_19] : memref<16x128xf32, #tpu.memory_space<vmem>>, vector<16x128xf32>
    %41 = arith.mulf %31, %40 : vector<16x128xf32>
    %42 = arith.mulf %25, %33 : vector<16x128xf32>
    %43 = arith.addf %41, %42 : vector<16x128xf32>
    %44 = math.tanh %43 : vector<16x128xf32>
    %45 = arith.mulf %39, %44 : vector<16x128xf32>
    %46 = arith.truncf %45 : vector<16x128xf32> to vector<16x128xbf16>
    %47 = arith.index_cast %12 : i32 to index
    %c0_20 = arith.constant 0 : index
    %48 = vector.load %arg15[%47, %c0_20] : memref<48x128xbf16, #tpu.memory_space<vmem>>, vector<16x128xbf16>
    tpu.vector_store %arg15[%47, %c0_20], %46 {strides = array<i32>} : memref<48x128xbf16, #tpu.memory_space<vmem>>, vector<16x128xbf16>,
    %49 = arith.addi %0, %c0_i32_8 : i32
    %c8_i32 = arith.constant 8 : i32
    %50 = arith.cmpi slt, %49, %c8_i32 : i32
    %51 = arith.extui %50 : i1 to i32
    %c0_i32_21 = arith.constant 0 : i32
    %52 = arith.cmpi ne, %51, %c0_i32_21 : i32
    scf.if %52 {
      %c0_70 = arith.constant 0 : index
      %c0_71 = arith.constant 0 : index
      %148 = vector.load %arg17[%c0_70, %c0_71] : memref<16x128xf32, #tpu.memory_space<vmem>>, vector<16x128xf32>
      tpu.vector_store %arg17[%c0_70, %c0_71], %45 {strides = array<i32>} : memref<16x128xf32, #tpu.memory_space<vmem>>, vector<16x128xf32>,
      %c0_72 = arith.constant 0 : index
      %c0_73 = arith.constant 0 : index
      %149 = vector.load %arg18[%c0_72, %c0_73] : memref<16x128xf32, #tpu.memory_space<vmem>>, vector<16x128xf32>
      tpu.vector_store %arg18[%c0_72, %c0_73], %43 {strides = array<i32>} : memref<16x128xf32, #tpu.memory_space<vmem>>, vector<16x128xf32>,
    } else {
    }
    %c1_i32 = arith.constant 1 : i32
    %c16_i32_22 = arith.constant 16 : i32
    %53 = arith.muli %c1_i32, %c16_i32_22 : i32
    %54 = tpu.assume_multiple %53, 16 : i32
    %55 = arith.index_cast %54 : i32 to index
    %c0_23 = arith.constant 0 : index
    %56 = vector.load %arg14[%55, %c0_23] : memref<48x512xf32, #tpu.memory_space<vmem>>, vector<16x512xf32>
    %c0_24 = arith.constant 0 : index
    %c0_25 = arith.constant 0 : index
    %57 = vector.load %arg17[%c0_24, %c0_25] : memref<16x128xf32, #tpu.memory_space<vmem>>, vector<16x128xf32>
    %58 = arith.truncf %57 : vector<16x128xf32> to vector<16x128xbf16>
    %c0_26 = arith.constant 0 : index
    %c0_27 = arith.constant 0 : index
    %59 = vector.load %arg7[%c0_26, %c0_27] : memref<128x512xbf16, #tpu.memory_space<vmem>>, vector<128x512xbf16>
    %cst_28 = arith.constant dense<0.000000e+00> : vector<16x512xf32>
    %60 = tpu.matmul %58, %59, %cst_28 {dimension_numbers = #tpu.dot_dimension_numbers<[1], [0], [0], [1], [0, 0, 1, 1], [], []>} : vector<16x128xbf16>, vector<128x512xbf16>, vector<16x512xf32> -> vector<16x512xf32>
    %61 = arith.addf %56, %60 : vector<16x512xf32>
    %62 = vector.extract_strided_slice %61 {offsets = [0, 0], sizes = [16, 128], strides = [1, 1]} : vector<16x512xf32> to vector<16x128xf32>
    %63 = arith.negf %62 : vector<16x128xf32>
    %64 = math.exp %63 : vector<16x128xf32>
    %cst_29 = arith.constant 1.000000e+00 : f32
    %65 = vector.broadcast %cst_29 : f32 to vector<16x128xf32>
    %66 = arith.addf %65, %64 : vector<16x128xf32>
    %67 = arith.divf %65, %66 : vector<16x128xf32>
    %68 = vector.extract_strided_slice %61 {offsets = [0, 128], sizes = [16, 128], strides = [1, 1]} : vector<16x512xf32> to vector<16x128xf32>
    %69 = arith.negf %68 : vector<16x128xf32>
    %70 = math.exp %69 : vector<16x128xf32>
    %cst_30 = arith.constant 1.000000e+00 : f32
    %71 = vector.broadcast %cst_30 : f32 to vector<16x128xf32>
    %72 = arith.addf %71, %70 : vector<16x128xf32>
    %73 = arith.divf %71, %72 : vector<16x128xf32>
    %74 = vector.extract_strided_slice %61 {offsets = [0, 256], sizes = [16, 128], strides = [1, 1]} : vector<16x512xf32> to vector<16x128xf32>
    %75 = math.tanh %74 : vector<16x128xf32>
    %76 = vector.extract_strided_slice %61 {offsets = [0, 384], sizes = [16, 128], strides = [1, 1]} : vector<16x512xf32> to vector<16x128xf32>
    %77 = arith.negf %76 : vector<16x128xf32>
    %78 = math.exp %77 : vector<16x128xf32>
    %cst_31 = arith.constant 1.000000e+00 : f32
    %79 = vector.broadcast %cst_31 : f32 to vector<16x128xf32>
    %80 = arith.addf %79, %78 : vector<16x128xf32>
    %81 = arith.divf %79, %80 : vector<16x128xf32>
    %c0_32 = arith.constant 0 : index
    %c0_33 = arith.constant 0 : index
    %82 = vector.load %arg18[%c0_32, %c0_33] : memref<16x128xf32, #tpu.memory_space<vmem>>, vector<16x128xf32>
    %83 = arith.mulf %73, %82 : vector<16x128xf32>
    %84 = arith.mulf %67, %75 : vector<16x128xf32>
    %85 = arith.addf %83, %84 : vector<16x128xf32>
    %86 = math.tanh %85 : vector<16x128xf32>
    %87 = arith.mulf %81, %86 : vector<16x128xf32>
    %88 = arith.truncf %87 : vector<16x128xf32> to vector<16x128xbf16>
    %89 = arith.index_cast %54 : i32 to index
    %c0_34 = arith.constant 0 : index
    %90 = vector.load %arg15[%89, %c0_34] : memref<48x128xbf16, #tpu.memory_space<vmem>>, vector<16x128xbf16>
    tpu.vector_store %arg15[%89, %c0_34], %88 {strides = array<i32>} : memref<48x128xbf16, #tpu.memory_space<vmem>>, vector<16x128xbf16>,
    %91 = arith.addi %0, %c1_i32 : i32
    %c8_i32_35 = arith.constant 8 : i32
    %92 = arith.cmpi slt, %91, %c8_i32_35 : i32
    %93 = arith.extui %92 : i1 to i32
    %c0_i32_36 = arith.constant 0 : i32
    %94 = arith.cmpi ne, %93, %c0_i32_36 : i32
    scf.if %94 {
      %c0_70 = arith.constant 0 : index
      %c0_71 = arith.constant 0 : index
      %148 = vector.load %arg17[%c0_70, %c0_71] : memref<16x128xf32, #tpu.memory_space<vmem>>, vector<16x128xf32>
      tpu.vector_store %arg17[%c0_70, %c0_71], %87 {strides = array<i32>} : memref<16x128xf32, #tpu.memory_space<vmem>>, vector<16x128xf32>,
      %c0_72 = arith.constant 0 : index
      %c0_73 = arith.constant 0 : index
      %149 = vector.load %arg18[%c0_72, %c0_73] : memref<16x128xf32, #tpu.memory_space<vmem>>, vector<16x128xf32>
      tpu.vector_store %arg18[%c0_72, %c0_73], %85 {strides = array<i32>} : memref<16x128xf32, #tpu.memory_space<vmem>>, vector<16x128xf32>,
    } else {
    }
    %c2_i32 = arith.constant 2 : i32
    %c16_i32_37 = arith.constant 16 : i32
    %95 = arith.muli %c2_i32, %c16_i32_37 : i32
    %96 = tpu.assume_multiple %95, 16 : i32
    %97 = arith.index_cast %96 : i32 to index
    %c0_38 = arith.constant 0 : index
    %98 = vector.load %arg14[%97, %c0_38] : memref<48x512xf32, #tpu.memory_space<vmem>>, vector<16x512xf32>
    %c0_39 = arith.constant 0 : index
    %c0_40 = arith.constant 0 : index
    %99 = vector.load %arg17[%c0_39, %c0_40] : memref<16x128xf32, #tpu.memory_space<vmem>>, vector<16x128xf32>
    %100 = arith.truncf %99 : vector<16x128xf32> to vector<16x128xbf16>
    %c0_41 = arith.constant 0 : index
    %c0_42 = arith.constant 0 : index
    %101 = vector.load %arg7[%c0_41, %c0_42] : memref<128x512xbf16, #tpu.memory_space<vmem>>, vector<128x512xbf16>
    %cst_43 = arith.constant dense<0.000000e+00> : vector<16x512xf32>
    %102 = tpu.matmul %100, %101, %cst_43 {dimension_numbers = #tpu.dot_dimension_numbers<[1], [0], [0], [1], [0, 0, 1, 1], [], []>} : vector<16x128xbf16>, vector<128x512xbf16>, vector<16x512xf32> -> vector<16x512xf32>
    %103 = arith.addf %98, %102 : vector<16x512xf32>
    %104 = vector.extract_strided_slice %103 {offsets = [0, 0], sizes = [16, 128], strides = [1, 1]} : vector<16x512xf32> to vector<16x128xf32>
    %105 = arith.negf %104 : vector<16x128xf32>
    %106 = math.exp %105 : vector<16x128xf32>
    %cst_44 = arith.constant 1.000000e+00 : f32
    %107 = vector.broadcast %cst_44 : f32 to vector<16x128xf32>
    %108 = arith.addf %107, %106 : vector<16x128xf32>
    %109 = arith.divf %107, %108 : vector<16x128xf32>
    %110 = vector.extract_strided_slice %103 {offsets = [0, 128], sizes = [16, 128], strides = [1, 1]} : vector<16x512xf32> to vector<16x128xf32>
    %111 = arith.negf %110 : vector<16x128xf32>
    %112 = math.exp %111 : vector<16x128xf32>
    %cst_45 = arith.constant 1.000000e+00 : f32
    %113 = vector.broadcast %cst_45 : f32 to vector<16x128xf32>
    %114 = arith.addf %113, %112 : vector<16x128xf32>
    %115 = arith.divf %113, %114 : vector<16x128xf32>
    %116 = vector.extract_strided_slice %103 {offsets = [0, 256], sizes = [16, 128], strides = [1, 1]} : vector<16x512xf32> to vector<16x128xf32>
    %117 = math.tanh %116 : vector<16x128xf32>
    %118 = vector.extract_strided_slice %103 {offsets = [0, 384], sizes = [16, 128], strides = [1, 1]} : vector<16x512xf32> to vector<16x128xf32>
    %119 = arith.negf %118 : vector<16x128xf32>
    %120 = math.exp %119 : vector<16x128xf32>
    %cst_46 = arith.constant 1.000000e+00 : f32
    %121 = vector.broadcast %cst_46 : f32 to vector<16x128xf32>
    %122 = arith.addf %121, %120 : vector<16x128xf32>
    %123 = arith.divf %121, %122 : vector<16x128xf32>
    %c0_47 = arith.constant 0 : index
    %c0_48 = arith.constant 0 : index
    %124 = vector.load %arg18[%c0_47, %c0_48] : memref<16x128xf32, #tpu.memory_space<vmem>>, vector<16x128xf32>
    %125 = arith.mulf %115, %124 : vector<16x128xf32>
    %126 = arith.mulf %109, %117 : vector<16x128xf32>
    %127 = arith.addf %125, %126 : vector<16x128xf32>
    %128 = math.tanh %127 : vector<16x128xf32>
    %129 = arith.mulf %123, %128 : vector<16x128xf32>
    %130 = arith.truncf %129 : vector<16x128xf32> to vector<16x128xbf16>
    %131 = arith.index_cast %96 : i32 to index
    %c0_49 = arith.constant 0 : index
    %132 = vector.load %arg15[%131, %c0_49] : memref<48x128xbf16, #tpu.memory_space<vmem>>, vector<16x128xbf16>
    tpu.vector_store %arg15[%131, %c0_49], %130 {strides = array<i32>} : memref<48x128xbf16, #tpu.memory_space<vmem>>, vector<16x128xbf16>,
    %133 = arith.addi %0, %c2_i32 : i32
    %c8_i32_50 = arith.constant 8 : i32
    %134 = arith.cmpi slt, %133, %c8_i32_50 : i32
    %135 = arith.extui %134 : i1 to i32
    %c0_i32_51 = arith.constant 0 : i32
    %136 = arith.cmpi ne, %135, %c0_i32_51 : i32
    scf.if %136 {
      %c0_70 = arith.constant 0 : index
      %c0_71 = arith.constant 0 : index
      %148 = vector.load %arg17[%c0_70, %c0_71] : memref<16x128xf32, #tpu.memory_space<vmem>>, vector<16x128xf32>
      tpu.vector_store %arg17[%c0_70, %c0_71], %129 {strides = array<i32>} : memref<16x128xf32, #tpu.memory_space<vmem>>, vector<16x128xf32>,
      %c0_72 = arith.constant 0 : index
      %c0_73 = arith.constant 0 : index
      %149 = vector.load %arg18[%c0_72, %c0_73] : memref<16x128xf32, #tpu.memory_space<vmem>>, vector<16x128xf32>
      tpu.vector_store %arg18[%c0_72, %c0_73], %127 {strides = array<i32>} : memref<16x128xf32, #tpu.memory_space<vmem>>, vector<16x128xf32>,
    } else {
    }
    %c3_i32_52 = arith.constant 3 : i32
    %c0_53 = arith.constant 0 : index
    %c0_54 = arith.constant 0 : index
    %137 = vector.load %arg15[%c0_53, %c0_54] : memref<48x128xbf16, #tpu.memory_space<vmem>>, vector<48x128xbf16>
    %c0_55 = arith.constant 0 : index
    %c0_56 = arith.constant 0 : index
    %138 = vector.load %arg9[%c0_55, %c0_56] : memref<128x128xbf16, #tpu.memory_space<vmem>>, vector<128x128xbf16>
    %cst_57 = arith.constant dense<0.000000e+00> : vector<48x128xf32>
    %139 = tpu.matmul %137, %138, %cst_57 {dimension_numbers = #tpu.dot_dimension_numbers<[1], [0], [0], [1], [0, 0, 1, 1], [], []>} : vector<48x128xbf16>, vector<128x128xbf16>, vector<48x128xf32> -> vector<48x128xf32>
    %c0_58 = arith.constant 0 : index
    %c0_59 = arith.constant 0 : index
    %140 = vector.load %arg10[%c0_58, %c0_59] : memref<1x128xf32, #tpu.memory_space<vmem>>, vector<1x128xf32>
    %141 = vector.broadcast %140 : vector<1x128xf32> to vector<48x128xf32>
    %142 = arith.addf %139, %141 : vector<48x128xf32>
    %c0_60 = arith.constant 0 : index
    %c0_61 = arith.constant 0 : index
    %143 = vector.load %arg11[%c0_60, %c0_61] : memref<48x128xf32, #tpu.memory_space<vmem>>, vector<48x128xf32>
    tpu.vector_store %arg11[%c0_60, %c0_61], %142 {strides = array<i32>} : memref<48x128xf32, #tpu.memory_space<vmem>>, vector<48x128xf32>,
    %c0_62 = arith.constant 0 : index
    %c0_63 = arith.constant 0 : index
    %144 = vector.load %arg17[%c0_62, %c0_63] : memref<16x128xf32, #tpu.memory_space<vmem>>, vector<16x128xf32>
    %c0_64 = arith.constant 0 : index
    %c0_65 = arith.constant 0 : index
    %145 = vector.load %arg12[%c0_64, %c0_65] : memref<16x128xf32, #tpu.memory_space<vmem>>, vector<16x128xf32>
    tpu.vector_store %arg12[%c0_64, %c0_65], %144 {strides = array<i32>} : memref<16x128xf32, #tpu.memory_space<vmem>>, vector<16x128xf32>,
    %c0_66 = arith.constant 0 : index
    %c0_67 = arith.constant 0 : index
    %146 = vector.load %arg18[%c0_66, %c0_67] : memref<16x128xf32, #tpu.memory_space<vmem>>, vector<16x128xf32>
    %c0_68 = arith.constant 0 : index
    %c0_69 = arith.constant 0 : index
    %147 = vector.load %arg13[%c0_68, %c0_69] : memref<16x128xf32, #tpu.memory_space<vmem>>, vector<16x128xf32>
    tpu.vector_store %arg13[%c0_68, %c0_69], %146 {strides = array<i32>} : memref<16x128xf32, #tpu.memory_space<vmem>>, vector<16x128xf32>,
    return
  }
  func.func @transform_0(%arg0: i32) -> (i32, i32) {
    %c0_i32 = arith.constant 0 : i32
    %c0_i32_0 = arith.constant 0 : i32
    return %arg0, %c0_i32 : i32, i32
  }
  func.func @transform_1(%arg0: i32) -> (i32, i32) {
    %c0_i32 = arith.constant 0 : i32
    %c0_i32_0 = arith.constant 0 : i32
    %c0_i32_1 = arith.constant 0 : i32
    return %c0_i32, %c0_i32_0 : i32, i32
  }
  func.func @transform_2(%arg0: i32) -> (i32, i32) {
    %c0_i32 = arith.constant 0 : i32
    %c0_i32_0 = arith.constant 0 : i32
    %c0_i32_1 = arith.constant 0 : i32
    return %c0_i32, %c0_i32_0 : i32, i32
  }
  func.func @transform_3(%arg0: i32) -> (i32, i32) {
    %c0_i32 = arith.constant 0 : i32
    %c0_i32_0 = arith.constant 0 : i32
    %c0_i32_1 = arith.constant 0 : i32
    return %c0_i32, %c0_i32_0 : i32, i32
  }
  func.func @transform_4(%arg0: i32) -> (i32, i32) {
    %c0_i32 = arith.constant 0 : i32
    %c0_i32_0 = arith.constant 0 : i32
    %c0_i32_1 = arith.constant 0 : i32
    return %c0_i32, %c0_i32_0 : i32, i32
  }
  func.func @transform_5(%arg0: i32) -> (i32, i32) {
    %c0_i32 = arith.constant 0 : i32
    %c0_i32_0 = arith.constant 0 : i32
    %c0_i32_1 = arith.constant 0 : i32
    return %c0_i32, %c0_i32_0 : i32, i32
  }
  func.func @transform_6(%arg0: i32) -> (i32, i32) {
    %c0_i32 = arith.constant 0 : i32
    %c0_i32_0 = arith.constant 0 : i32
    %c0_i32_1 = arith.constant 0 : i32
    return %c0_i32, %c0_i32_0 : i32, i32
  }
  func.func @transform_7(%arg0: i32) -> (i32, i32) {
    %c0_i32 = arith.constant 0 : i32
    %c0_i32_0 = arith.constant 0 : i32
    %c0_i32_1 = arith.constant 0 : i32
    return %c0_i32, %c0_i32_0 : i32, i32
  }
  func.func @transform_8(%arg0: i32) -> (i32, i32) {
    %c0_i32 = arith.constant 0 : i32
    %c0_i32_0 = arith.constant 0 : i32
    %c0_i32_1 = arith.constant 0 : i32
    return %c0_i32, %c0_i32_0 : i32, i32
  }
  func.func @transform_9(%arg0: i32) -> (i32, i32) {
    %c0_i32 = arith.constant 0 : i32
    %c0_i32_0 = arith.constant 0 : i32
    %c0_i32_1 = arith.constant 0 : i32
    return %c0_i32, %c0_i32_0 : i32, i32
  }
  func.func @transform_10(%arg0: i32) -> (i32, i32) {
    %c0_i32 = arith.constant 0 : i32
    %c0_i32_0 = arith.constant 0 : i32
    return %arg0, %c0_i32 : i32, i32
  }
  func.func @transform_11(%arg0: i32) -> (i32, i32) {
    %c0_i32 = arith.constant 0 : i32
    %c0_i32_0 = arith.constant 0 : i32
    %c0_i32_1 = arith.constant 0 : i32
    return %c0_i32, %c0_i32_0 : i32, i32
  }
  func.func @transform_12(%arg0: i32) -> (i32, i32) {
    %c0_i32 = arith.constant 0 : i32
    %c0_i32_0 = arith.constant 0 : i32
    %c0_i32_1 = arith.constant 0 : i32
    return %c0_i32, %c0_i32_0 : i32, i32
  }
}

</mosaic_0001>

<llo_original>
// kernel: tpu_custom_call.1
$region0: #{tpu_custom_call.1}
  #allocation0 [shape = 'u32[]', space=smem, size = 0x4, offset = 0x4, fixed_abs, tag = 'smem constant byte address 0x4 - core index']
  #allocation1 [shape = 'u32[72,128]{1,0:T(1,128)}', space=vmem, size = 0x9000, scoped, tag = 'internal scratch']
  #allocation2 [shape = 'f32[48,512]{1,0:T(8,128)}', space=vmem, size = 0x18000, scoped, tag = 'scratch operand']
  #allocation3 [shape = 'bf16[48,128]{1,0:T(8,128)(2,1)}', space=vmem, size = 0x3000, scoped, tag = 'scratch operand']
  #allocation4 [shape = 'f32[16,512]{1,0:T(8,128)}', space=vmem, size = 0x8000, scoped, tag = 'scratch operand']
  #allocation5 [shape = 'f32[16,128]{1,0:T(8,128)}', space=vmem, size = 0x2000, scoped, tag = 'scratch operand']
  #allocation6 [shape = 'f32[16,128]{1,0:T(8,128)}', space=vmem, size = 0x2000, scoped, tag = 'scratch operand']
  %s0 = inlined_call_operand.vmem [shape: bf16[144,8], index: 0, kind: input, shape index: {}]
  %s1 = inlined_call_operand.vmem [shape: bf16[16,8], index: 1, kind: input, shape index: {}]
  %s2 = inlined_call_operand.vmem [shape: f32[16,128], index: 2, kind: input, shape index: {}]
  %s3 = inlined_call_operand.hbm [shape: f32[16,128], index: 3, kind: input, shape index: {}]
  %s4 = inlined_call_operand.hbm [shape: bf16[8,512], index: 4, kind: input, shape index: {}]
  %s5 = inlined_call_operand.hbm [shape: bf16[8,512], index: 5, kind: input, shape index: {}]
  %s6 = inlined_call_operand.hbm [shape: bf16[128,512], index: 6, kind: input, shape index: {}]
  %s7 = inlined_call_operand.vmem [shape: f32[1,512], index: 7, kind: input, shape index: {}]
  %s8 = inlined_call_operand.vmem [shape: bf16[128,128], index: 8, kind: input, shape index: {}]
  %s9 = inlined_call_operand.vmem [shape: f32[1,128], index: 9, kind: input, shape index: {}]
  %s10 = inlined_call_operand.hbm [shape: f32[144,128], index: 10, kind: output, shape index: {0}]
  %s11 = inlined_call_operand.hbm [shape: f32[16,128], index: 11, kind: output, shape index: {1}]
  %s12 = inlined_call_operand.hbm [shape: f32[16,128], index: 12, kind: output, shape index: {2}]
  %13 = xla_tuple %s10, %s11, %s12
  %s14 = sld [smem:[#allocation0]]
  $region121: #{tpu_custom_call.1} parent=0
    _
  %s16 = ssub.s32 1, %s14
  %s17 = scalar_select 0, %s16, %s14
  $region1: #{tpu_custom_call.1} parent=0
    #allocation7 [shape = 'u8[8192]{0}', space=vmem, size = 0x2000, scoped, tag = 'input window, operand 3, single buffered']
    #allocation8 [shape = 's32[2]{0}', space=sflag, size = 0x8, scoped, tag = 'scoped memory for tpu_custom_call.1']
    #allocation9 [shape = 's32[2]{0}', space=sflag, size = 0x8, scoped, tag = 'scoped memory for tpu_custom_call.1']
    #allocation10 [shape = 'u8[8192]{0}', space=vmem, size = 0x2000, scoped, tag = 'input window, operand 4, single buffered']
    #allocation11 [shape = 's32[1]{0}', space=sflag, size = 0x4, scoped, tag = 'scoped memory for tpu_custom_call.1']
    #allocation12 [shape = 'u8[8192]{0}', space=vmem, size = 0x2000, scoped, tag = 'input window, operand 5, single buffered']
    #allocation13 [shape = 'u8[131072]{0}', space=vmem, size = 0x20000, scoped, tag = 'input window, operand 6, single buffered']
    #allocation14 [shape = 's32[1]{0}', space=sflag, size = 0x4, scoped, tag = 'scoped memory for tpu_custom_call.1']
    #allocation15 [shape = 'u8[49152]{0}', space=vmem, size = 0xc000, scoped, tag = 'output window, operand 0']
    #allocation16 [shape = 'u8[8192]{0}', space=vmem, size = 0x2000, scoped, tag = 'output window, operand 1, single buffered']
    #allocation17 [shape = 's32[1]{0}', space=sflag, size = 0x4, scoped, tag = 'scoped memory for tpu_custom_call.1']
    #allocation18 [shape = 'u8[8192]{0}', space=vmem, size = 0x2000, scoped, tag = 'output window, operand 2, single buffered']
    %18 = vsyncpa [#allocation8], 0
    %19 = vsyncpa [#allocation11], 0
    %20 = vsyncpa [#allocation14], 0
    %21 = vsyncpa [#allocation9], 0
    %s22 = scalar_lea.sflag [#allocation9], 1
    %23 = vsyncpa %s22, 0
    %24 = vsyncpa [#allocation17], 0
    loop: start=0, step=1, limit=5
    $region2: #{tpu_custom_call.1} parent=1 // loop_pre_header
      _
    $region3: #{tpu_custom_call.1} parent=1 // loop_header
      %s26 = sphi 0, %s30
      %p27 = scmp.ge.s32.totalorder %s26, 5
      %s36 = sphi 0, %s38
      %s39 = sphi 0, %s36
      %s40 = sphi 0, %s39
      %s56 = sphi 0, %s40
      %s60 = sphi 0, %s60
      %s62 = sphi 0, %s60
      %s63 = sphi 0, %s62
      %s77 = sphi 0, %s63
      %s81 = sphi 0, %s81
      %s83 = sphi 0, %s81
      %s84 = sphi 0, %s83
      %s98 = sphi 0, %s84
      %s102 = sphi 0, %s102
      %s104 = sphi 0, %s102
      %s105 = sphi 0, %s104
      %s119 = sphi 0, %s105
      %s123 = sphi 0, %s123
      %s125 = sphi 0, %s123
      %s126 = sphi 0, %s125
      %s140 = sphi 0, %s126
      %s144 = sphi 0, %s144
      %s146 = sphi 0, %s144
      %s147 = sphi 0, %s146
      %s161 = sphi 0, %s147
      %s165 = sphi 0, %s165
      %s167 = sphi 0, %s165
      %s168 = sphi 0, %s167
      %s182 = sphi 0, %s168
      %s186 = sphi 0, %s186
      %s188 = sphi 0, %s186
      %s189 = sphi 0, %s188
      %s203 = sphi 0, %s189
      %s207 = sphi 0, %s207
      %s209 = sphi 0, %s207
      %s210 = sphi 0, %s209
      %s224 = sphi 0, %s210
      %s228 = sphi 0, %s228
      %s230 = sphi 0, %s228
      %s231 = sphi 0, %s230
      %s245 = sphi 0, %s231
      %s251 = sphi 0, %s253
      %s254 = sphi 0, %s251
      %s255 = sphi 0, %s254
      %s271 = sphi 0, %s255
      %s275 = sphi 0, %s275
      %s277 = sphi 0, %s275
      %s278 = sphi 0, %s277
      %s292 = sphi 0, %s278
      %s296 = sphi 0, %s296
      %s298 = sphi 0, %s296
      %s299 = sphi 0, %s298
      %s313 = sphi 0, %s299
    $region4: #{tpu_custom_call.1} parent=1 // loop_header_branch
      %29 = sbr.rel (%p27) target = $region8
    $region5: #{tpu_custom_call.1} parent=1 // loop_body
      %s31 = ssub.s32 %s26, 1
      %s32 = ssub.s32 %s26, 2
      %s33 = sadd.s32 %s26, 1
      %s34 = ssub.s32 %s26, %s33
      %p35 = scmp.eq.s32.totalorder %s34, 0
      %s37 = sadd.s32 %s36, 1
      %s38 = scalar_select %p35, %s36, %s37
      %p41 = pneg %p35
      %p42 = scmp.eq.s32.totalorder %s26, 2
      %p43 = por %p41, %p42
      %p44 = scmp.ne.s32.totalorder %s36, %s39
      %p45 = scmp.eq.s32.totalorder %s26, 0
      %p46 = por %p44, %p45
      %p47 = scmp.ne.s32.totalorder %s36, %s39
      %p48 = scmp.eq.s32.totalorder %s31, 2
      %p49 = por %p47, %p48
      %p50 = scmp.ne.s32.totalorder %s39, %s40
      %p51 = scmp.eq.s32.totalorder %s31, 0
      %p52 = por %p50, %p51
      %p53 = scmp.ne.s32.totalorder %s39, %s40
      %p54 = scmp.eq.s32.totalorder %s32, 2
      %p55 = por %p53, %p54
      %p57 = scmp.ne.s32.totalorder %s40, %s56
      %p58 = scmp.eq.s32.totalorder %s32, 0
      %p59 = por %p57, %p58
      %s61 = sadd.s32 %s60, 1
      %p64 = scmp.eq.s32.totalorder %s26, 2
      %p65 = scmp.ne.s32.totalorder %s60, %s62
      %p66 = scmp.eq.s32.totalorder %s26, 0
      %p67 = por %p65, %p66
      %p68 = scmp.ne.s32.totalorder %s60, %s62
      %p69 = scmp.eq.s32.totalorder %s31, 2
      %p70 = por %p68, %p69
      %p71 = scmp.ne.s32.totalorder %s62, %s63
      %p72 = scmp.eq.s32.totalorder %s31, 0
      %p73 = por %p71, %p72
      %p74 = scmp.ne.s32.totalorder %s62, %s63
      %p75 = scmp.eq.s32.totalorder %s32, 2
      %p76 = por %p74, %p75
      %p78 = scmp.ne.s32.totalorder %s63, %s77
      %p79 = scmp.eq.s32.totalorder %s32, 0
      %p80 = por %p78, %p79
      %s82 = sadd.s32 %s81, 1
      %p85 = scmp.eq.s32.totalorder %s26, 2
      %p86 = scmp.ne.s32.totalorder %s81, %s83
      %p87 = scmp.eq.s32.totalorder %s26, 0
      %p88 = por %p86, %p87
      %p89 = scmp.ne.s32.totalorder %s81, %s83
      %p90 = scmp.eq.s32.totalorder %s31, 2
      %p91 = por %p89, %p90
      %p92 = scmp.ne.s32.totalorder %s83, %s84
      %p93 = scmp.eq.s32.totalorder %s31, 0
      %p94 = por %p92, %p93
      %p95 = scmp.ne.s32.totalorder %s83, %s84
      %p96 = scmp.eq.s32.totalorder %s32, 2
      %p97 = por %p95, %p96
      %p99 = scmp.ne.s32.totalorder %s84, %s98
      %p100 = scmp.eq.s32.totalorder %s32, 0
      %p101 = por %p99, %p100
      %s103 = sadd.s32 %s102, 1
      %p106 = scmp.eq.s32.totalorder %s26, 2
      %p107 = scmp.ne.s32.totalorder %s102, %s104
      %p108 = scmp.eq.s32.totalorder %s26, 0
      %p109 = por %p107, %p108
      %p110 = scmp.ne.s32.totalorder %s102, %s104
      %p111 = scmp.eq.s32.totalorder %s31, 2
      %p112 = por %p110, %p111
      %p113 = scmp.ne.s32.totalorder %s104, %s105
      %p114 = scmp.eq.s32.totalorder %s31, 0
      %p115 = por %p113, %p114
      %p116 = scmp.ne.s32.totalorder %s104, %s105
      %p117 = scmp.eq.s32.totalorder %s32, 2
      %p118 = por %p116, %p117
      %p120 = scmp.ne.s32.totalorder %s105, %s119
      %p121 = scmp.eq.s32.totalorder %s32, 0
      %p122 = por %p120, %p121
      %s124 = sadd.s32 %s123, 1
      %p127 = scmp.eq.s32.totalorder %s26, 2
      %p128 = scmp.ne.s32.totalorder %s123, %s125
      %p129 = scmp.eq.s32.totalorder %s26, 0
      %p130 = por %p128, %p129
      %p131 = scmp.ne.s32.totalorder %s123, %s125
      %p132 = scmp.eq.s32.totalorder %s31, 2
      %p133 = por %p131, %p132
      %p134 = scmp.ne.s32.totalorder %s125, %s126
      %p135 = scmp.eq.s32.totalorder %s31, 0
      %p136 = por %p134, %p135
      %p137 = scmp.ne.s32.totalorder %s125, %s126
      %p138 = scmp.eq.s32.totalorder %s32, 2
      %p139 = por %p137, %p138
      %p141 = scmp.ne.s32.totalorder %s126, %s140
      %p142 = scmp.eq.s32.totalorder %s32, 0
      %p143 = por %p141, %p142
      %s145 = sadd.s32 %s144, 1
      %p148 = scmp.eq.s32.totalorder %s26, 2
      %p149 = scmp.ne.s32.totalorder %s144, %s146
      %p150 = scmp.eq.s32.totalorder %s26, 0
      %p151 = por %p149, %p150
      %p152 = scmp.ne.s32.totalorder %s144, %s146
      %p153 = scmp.eq.s32.totalorder %s31, 2
      %p154 = por %p152, %p153
      %p155 = scmp.ne.s32.totalorder %s146, %s147
      %p156 = scmp.eq.s32.totalorder %s31, 0
      %p157 = por %p155, %p156
      %p158 = scmp.ne.s32.totalorder %s146, %s147
      %p159 = scmp.eq.s32.totalorder %s32, 2
      %p160 = por %p158, %p159
      %p162 = scmp.ne.s32.totalorder %s147, %s161
      %p163 = scmp.eq.s32.totalorder %s32, 0
      %p164 = por %p162, %p163
      %s166 = sadd.s32 %s165, 1
      %p169 = scmp.eq.s32.totalorder %s26, 2
      %p170 = scmp.ne.s32.totalorder %s165, %s167
      %p171 = scmp.eq.s32.totalorder %s26, 0
      %p172 = por %p170, %p171
      %p173 = scmp.ne.s32.totalorder %s165, %s167
      %p174 = scmp.eq.s32.totalorder %s31, 2
      %p175 = por %p173, %p174
      %p176 = scmp.ne.s32.totalorder %s167, %s168
      %p177 = scmp.eq.s32.totalorder %s31, 0
      %p178 = por %p176, %p177
      %p179 = scmp.ne.s32.totalorder %s167, %s168
      %p180 = scmp.eq.s32.totalorder %s32, 2
      %p181 = por %p179, %p180
      %p183 = scmp.ne.s32.totalorder %s168, %s182
      %p184 = scmp.eq.s32.totalorder %s32, 0
      %p185 = por %p183, %p184
      %s187 = sadd.s32 %s186, 1
      %p190 = scmp.eq.s32.totalorder %s26, 2
      %p191 = scmp.ne.s32.totalorder %s186, %s188
      %p192 = scmp.eq.s32.totalorder %s26, 0
      %p193 = por %p191, %p192
      %p194 = scmp.ne.s32.totalorder %s186, %s188
      %p195 = scmp.eq.s32.totalorder %s31, 2
      %p196 = por %p194, %p195
      %p197 = scmp.ne.s32.totalorder %s188, %s189
      %p198 = scmp.eq.s32.totalorder %s31, 0
      %p199 = por %p197, %p198
      %p200 = scmp.ne.s32.totalorder %s188, %s189
      %p201 = scmp.eq.s32.totalorder %s32, 2
      %p202 = por %p200, %p201
      %p204 = scmp.ne.s32.totalorder %s189, %s203
      %p205 = scmp.eq.s32.totalorder %s32, 0
      %p206 = por %p204, %p205
      %s208 = sadd.s32 %s207, 1
      %p211 = scmp.eq.s32.totalorder %s26, 2
      %p212 = scmp.ne.s32.totalorder %s207, %s209
      %p213 = scmp.eq.s32.totalorder %s26, 0
      %p214 = por %p212, %p213
      %p215 = scmp.ne.s32.totalorder %s207, %s209
      %p216 = scmp.eq.s32.totalorder %s31, 2
      %p217 = por %p215, %p216
      %p218 = scmp.ne.s32.totalorder %s209, %s210
      %p219 = scmp.eq.s32.totalorder %s31, 0
      %p220 = por %p218, %p219
      %p221 = scmp.ne.s32.totalorder %s209, %s210
      %p222 = scmp.eq.s32.totalorder %s32, 2
      %p223 = por %p221, %p222
      %p225 = scmp.ne.s32.totalorder %s210, %s224
      %p226 = scmp.eq.s32.totalorder %s32, 0
      %p227 = por %p225, %p226
      %s229 = sadd.s32 %s228, 1
      %p232 = scmp.eq.s32.totalorder %s26, 2
      %p233 = scmp.ne.s32.totalorder %s228, %s230
      %p234 = scmp.eq.s32.totalorder %s26, 0
      %p235 = por %p233, %p234
      %p236 = scmp.ne.s32.totalorder %s228, %s230
      %p237 = scmp.eq.s32.totalorder %s31, 2
      %p238 = por %p236, %p237
      %p239 = scmp.ne.s32.totalorder %s230, %s231
      %p240 = scmp.eq.s32.totalorder %s31, 0
      %p241 = por %p239, %p240
      %p242 = scmp.ne.s32.totalorder %s230, %s231
      %p243 = scmp.eq.s32.totalorder %s32, 2
      %p244 = por %p242, %p243
      %p246 = scmp.ne.s32.totalorder %s231, %s245
      %p247 = scmp.eq.s32.totalorder %s32, 0
      %p248 = por %p246, %p247
      %s249 = ssub.s32 %s26, %s33
      %p250 = scmp.eq.s32.totalorder %s249, 0
      %s252 = sadd.s32 %s251, 1
      %s253 = scalar_select %p250, %s251, %s252
      %p256 = pneg %p250
      %p257 = scmp.eq.s32.totalorder %s26, 2
      %p258 = por %p256, %p257
      %p259 = scmp.ne.s32.totalorder %s251, %s254
      %p260 = scmp.eq.s32.totalorder %s26, 0
      %p261 = por %p259, %p260
      %p262 = scmp.ne.s32.totalorder %s251, %s254
      %p263 = scmp.eq.s32.totalorder %s31, 2
      %p264 = por %p262, %p263
      %p265 = scmp.ne.s32.totalorder %s254, %s255
      %p266 = scmp.eq.s32.totalorder %s31, 0
      %p267 = por %p265, %p266
      %p268 = scmp.ne.s32.totalorder %s254, %s255
      %p269 = scmp.eq.s32.totalorder %s32, 2
      %p270 = por %p268, %p269
      %p272 = scmp.ne.s32.totalorder %s255, %s271
      %p273 = scmp.eq.s32.totalorder %s32, 0
      %p274 = por %p272, %p273
      %s276 = sadd.s32 %s275, 1
      %p279 = scmp.eq.s32.totalorder %s26, 2
      %p280 = scmp.ne.s32.totalorder %s275, %s277
      %p281 = scmp.eq.s32.totalorder %s26, 0
      %p282 = por %p280, %p281
      %p283 = scmp.ne.s32.totalorder %s275, %s277
      %p284 = scmp.eq.s32.totalorder %s31, 2
      %p285 = por %p283, %p284
      %p286 = scmp.ne.s32.totalorder %s277, %s278
      %p287 = scmp.eq.s32.totalorder %s31, 0
      %p288 = por %p286, %p287
      %p289 = scmp.ne.s32.totalorder %s277, %s278
      %p290 = scmp.eq.s32.totalorder %s32, 2
      %p291 = por %p289, %p290
      %p293 = scmp.ne.s32.totalorder %s278, %s292
      %p294 = scmp.eq.s32.totalorder %s32, 0
      %p295 = por %p293, %p294
      %s297 = sadd.s32 %s296, 1
      %p300 = scmp.eq.s32.totalorder %s26, 2
      %p301 = scmp.ne.s32.totalorder %s296, %s298
      %p302 = scmp.eq.s32.totalorder %s26, 0
      %p303 = por %p301, %p302
      %p304 = scmp.ne.s32.totalorder %s296, %s298
      %p305 = scmp.eq.s32.totalorder %s31, 2
      %p306 = por %p304, %p305
      %p307 = scmp.ne.s32.totalorder %s298, %s299
      %p308 = scmp.eq.s32.totalorder %s31, 0
      %p309 = por %p307, %p308
      %p310 = scmp.ne.s32.totalorder %s298, %s299
      %p311 = scmp.eq.s32.totalorder %s32, 2
      %p312 = por %p310, %p311
      %p314 = scmp.ne.s32.totalorder %s299, %s313
      %p315 = scmp.eq.s32.totalorder %s32, 0
      %p316 = por %p314, %p315
      %p317 = scmp.le.s32.totalorder 1, %s26
      %p318 = scmp.lt.s32.totalorder %s26, 4
      %p319 = pnand %p317, %p318
      %p320 = pneg %p319
      // Predicated region
      $region9: #{tpu_custom_call.1} parent=5 // pred_check
        _
      $region10: #{tpu_custom_call.1} parent=5 // pred_check_branch
        %322 = sbr.rel (%p319) target = $region12
      $region11: #{tpu_custom_call.1} parent=5 // pred_region
        %s323 = ssub.s32 %s26, 1
        // Predicated region
        $region13: #{tpu_custom_call.1} parent=11 // pred_check
          %p324 = pneg %p73
        $region14: #{tpu_custom_call.1} parent=11 // pred_check_branch
          %326 = sbr.rel (%p324) target = $region16
        $region15: #{tpu_custom_call.1} parent=11 // pred_region
          _
        $region16: #{tpu_custom_call.1} parent=11 // pred_fallthru
          _
        // Predicated region
        $region17: #{tpu_custom_call.1} parent=11 // pred_check
          %p327 = pneg %p94
        $region18: #{tpu_custom_call.1} parent=11 // pred_check_branch
          %329 = sbr.rel (%p327) target = $region20
        $region19: #{tpu_custom_call.1} parent=11 // pred_region
          _
        $region20: #{tpu_custom_call.1} parent=11 // pred_fallthru
          _
        // Predicated region
        $region21: #{tpu_custom_call.1} parent=11 // pred_check
          %p330 = pneg %p115
        $region22: #{tpu_custom_call.1} parent=11 // pred_check_branch
          %332 = sbr.rel (%p330) target = $region24
        $region23: #{tpu_custom_call.1} parent=11 // pred_region
          %334 = vsyncadd [#allocation8], 0
          %s335 = sshll.u32 %s3, 4
          %s336 = int_to_ptr.hbm [resolvable:$true] %s335
          %s337 = sshll.u32 [#allocation7], 4
          %s338 = int_to_ptr.vmem [resolvable:$true] %s337
          %343 = dma.hbm_to_vmem [thread:$0]  %s336, 256, %s338, [#allocation8], 128, 128, 8
        $region24: #{tpu_custom_call.1} parent=11 // pred_fallthru
          _
        // Predicated region
        $region25: #{tpu_custom_call.1} parent=11 // pred_check
          %p344 = pneg %p136
        $region26: #{tpu_custom_call.1} parent=11 // pred_check_branch
          %346 = sbr.rel (%p344) target = $region28
        $region27: #{tpu_custom_call.1} parent=11 // pred_region
          %348 = vsyncadd [#allocation11], 0
          %s350 = sshll.u32 %s4, 4
          %s351 = int_to_ptr.hbm [resolvable:$true] %s350
          %s352 = sshll.u32 [#allocation10], 4
          %s353 = int_to_ptr.vmem [resolvable:$true] %s352
          %355 = dma.hbm_to_vmem [thread:$0]  %s351, 256, %s353, [#allocation11]
        $region28: #{tpu_custom_call.1} parent=11 // pred_fallthru
          _
        // Predicated region
        $region29: #{tpu_custom_call.1} parent=11 // pred_check
          %p356 = pneg %p157
        $region30: #{tpu_custom_call.1} parent=11 // pred_check_branch
          %358 = sbr.rel (%p356) target = $region32
        $region31: #{tpu_custom_call.1} parent=11 // pred_region
          %360 = vsyncadd [#allocation11], 0
          %s362 = sshll.u32 %s5, 4
          %s363 = int_to_ptr.hbm [resolvable:$true] %s362
          %s364 = sshll.u32 [#allocation12], 4
          %s365 = int_to_ptr.vmem [resolvable:$true] %s364
          %367 = dma.hbm_to_vmem [thread:$0]  %s363, 256, %s365, [#allocation11]
        $region32: #{tpu_custom_call.1} parent=11 // pred_fallthru
          _
        // Predicated region
        $region33: #{tpu_custom_call.1} parent=11 // pred_check
          %p368 = pneg %p178
        $region34: #{tpu_custom_call.1} parent=11 // pred_check_branch
          %370 = sbr.rel (%p368) target = $region36
        $region35: #{tpu_custom_call.1} parent=11 // pred_region
          %372 = vsyncadd [#allocation14], 0
          %s373 = sshll.u32 %s6, 4
          %s374 = int_to_ptr.hbm [resolvable:$true] %s373
          %s375 = sshll.u32 [#allocation13], 4
          %s376 = int_to_ptr.vmem [resolvable:$true] %s375
          %381 = dma.hbm_to_vmem [thread:$0]  %s374, 4096, %s376, [#allocation14], 256, 256, 16
        $region36: #{tpu_custom_call.1} parent=11 // pred_fallthru
          _
        // Predicated region
        $region37: #{tpu_custom_call.1} parent=11 // pred_check
          %p382 = pneg %p199
        $region38: #{tpu_custom_call.1} parent=11 // pred_check_branch
          %384 = sbr.rel (%p382) target = $region40
        $region39: #{tpu_custom_call.1} parent=11 // pred_region
          _
        $region40: #{tpu_custom_call.1} parent=11 // pred_fallthru
          _
        // Predicated region
        $region41: #{tpu_custom_call.1} parent=11 // pred_check
          %p385 = pneg %p220
        $region42: #{tpu_custom_call.1} parent=11 // pred_check_branch
          %387 = sbr.rel (%p385) target = $region44
        $region43: #{tpu_custom_call.1} parent=11 // pred_region
          _
        $region44: #{tpu_custom_call.1} parent=11 // pred_fallthru
          _
        // Predicated region
        $region45: #{tpu_custom_call.1} parent=11 // pred_check
          %p388 = pneg %p241
        $region46: #{tpu_custom_call.1} parent=11 // pred_check_branch
          %390 = sbr.rel (%p388) target = $region48
        $region47: #{tpu_custom_call.1} parent=11 // pred_region
          _
        $region48: #{tpu_custom_call.1} parent=11 // pred_fallthru
          _
      $region12: #{tpu_custom_call.1} parent=5 // pred_fallthru
        _
      %p391 = scmp.lt.s32.totalorder %s26, 3
      // Predicated region
      $region49: #{tpu_custom_call.1} parent=5 // pred_check
        %p392 = pneg %p391
      $region50: #{tpu_custom_call.1} parent=5 // pred_check_branch
        %394 = sbr.rel (%p392) target = $region52
      $region51: #{tpu_custom_call.1} parent=5 // pred_region
        // Predicated region
        $region53: #{tpu_custom_call.1} parent=51 // pred_check
          %p395 = pneg %p46
        $region54: #{tpu_custom_call.1} parent=51 // pred_check_branch
          %397 = sbr.rel (%p395) target = $region56
        $region55: #{tpu_custom_call.1} parent=51 // pred_region
          %s398 = smul.u32 6, %s26
          %p399 = scmp.lt.s32.totalorder %s398, 17
          %s400 = scalar_select %p399, %s398, 17
          %s401 = smul.addr %s400, 4
          %s402 = scalar_lea.vmem %s0, %s401
          %s403 = smul.u32 6, %s26
        $region56: #{tpu_custom_call.1} parent=51 // pred_fallthru
          _
      $region52: #{tpu_custom_call.1} parent=5 // pred_fallthru
        _
      %p404 = scmp.le.s32.totalorder 1, %s26
      %p405 = scmp.lt.s32.totalorder %s26, 4
      %p406 = pnand %p404, %p405
      %p407 = pneg %p406
      // Predicated region
      $region57: #{tpu_custom_call.1} parent=5 // pred_check
        _
      $region58: #{tpu_custom_call.1} parent=5 // pred_check_branch
        %409 = sbr.rel (%p406) target = $region60
      $region59: #{tpu_custom_call.1} parent=5 // pred_region
        %s410 = ssub.s32 %s26, 1
        // Predicated region
        $region61: #{tpu_custom_call.1} parent=59 // pred_check
          %p411 = pneg %p115
        $region62: #{tpu_custom_call.1} parent=59 // pred_check_branch
          %413 = sbr.rel (%p411) target = $region64
        $region63: #{tpu_custom_call.1} parent=59 // pred_region
          %415 = dma.done [#allocation8], 256
        $region64: #{tpu_custom_call.1} parent=59 // pred_fallthru
          _
        // Predicated region
        $region65: #{tpu_custom_call.1} parent=59 // pred_check
          %p416 = pneg %p136
        $region66: #{tpu_custom_call.1} parent=59 // pred_check_branch
          %418 = sbr.rel (%p416) target = $region68
        $region67: #{tpu_custom_call.1} parent=59 // pred_region
          %420 = dma.done [#allocation11], 256
        $region68: #{tpu_custom_call.1} parent=59 // pred_fallthru
          _
        // Predicated region
        $region69: #{tpu_custom_call.1} parent=59 // pred_check
          %p421 = pneg %p157
        $region70: #{tpu_custom_call.1} parent=59 // pred_check_branch
          %423 = sbr.rel (%p421) target = $region72
        $region71: #{tpu_custom_call.1} parent=59 // pred_region
          %425 = dma.done [#allocation11], 256
        $region72: #{tpu_custom_call.1} parent=59 // pred_fallthru
          _
        // Predicated region
        $region73: #{tpu_custom_call.1} parent=59 // pred_check
          %p426 = pneg %p178
        $region74: #{tpu_custom_call.1} parent=59 // pred_check_branch
          %428 = sbr.rel (%p426) target = $region76
        $region75: #{tpu_custom_call.1} parent=59 // pred_region
          %430 = dma.done [#allocation14], 4096
        $region76: #{tpu_custom_call.1} parent=59 // pred_fallthru
          _
        %s431 = smul.u32 6, %s31
        %p432 = scmp.lt.s32.totalorder %s431, 17
        %s433 = scalar_select %p432, %s431, 17
        %s434 = smul.addr %s433, 4
        %s435 = scalar_lea.vmem %s0, %s434
        %p436 = pneg %p52
        %p437 = pneg %p49
        %p438 = pneg %p73
        %p439 = pneg %p70
        %p440 = pneg %p94
        %p441 = pneg %p91
        %p442 = pneg %p115
        %p443 = pneg %p112
        %p444 = pneg %p136
        %p445 = pneg %p133
        %p446 = pneg %p157
        %p447 = pneg %p154
        %p448 = pneg %p178
        %p449 = pneg %p175
        %p450 = pneg %p199
        %p451 = pneg %p196
        %p452 = pneg %p220
        %p453 = pneg %p217
        %p454 = pneg %p241
        %p455 = pneg %p238
        %p456 = pneg %p267
        %p457 = pneg %p264
        %s458 = sand.u32 %s254, 1
        %s459 = scalar_lea.sflag [#allocation9], %s458
        %s460 = sand.u32 %s254, 1
        %s461 = smul.addr %s460, 48
        %s462 = scalar_lea.vmem [#allocation15], %s461
        %p463 = pneg %p288
        %p464 = pneg %p285
        %p465 = pneg %p309
        %p466 = pneg %p306
        %s467 = smul.u32 6, %s31
        %p468 = scmp.lt.s32.totalorder %s467, 17
        %s469 = scalar_select %p468, %s467, 17
        %s470 = smul.addr %s469, 4
        %s471 = scalar_lea.vmem %s0, %s470
        %s472 = smul.u32 6, %s31
        %s473 = smul.u32 6, %s31
        %s475 = smul.u32 %s31, 3
        %p476 = scmp.eq.s32.totalorder %s31, 0
        // Predicated region
        $region77: #{tpu_custom_call.1} parent=59 // pred_check
          %p477 = pneg %p476
        $region78: #{tpu_custom_call.1} parent=59 // pred_check_branch
          %479 = sbr.rel (%p477) target = $region80
        $region79: #{tpu_custom_call.1} parent=59 // pred_region
          %v480 = vld [vmem:[%s2] sm:$0xff]
          %v481 = vld [vmem:[%s2 + $0x8] sm:$0xff]
          %482 = vst [vmem:[#allocation5] sm:$0xff] %v480
          %483 = vst [vmem:[#allocation5 + $0x8] sm:$0xff] %v481
          %v484 = vld [vmem:[#allocation7] sm:$0xff]
          %v485 = vld [vmem:[#allocation7 + $0x8] sm:$0xff]
          %486 = vst [vmem:[#allocation6] sm:$0xff] %v484
          %487 = vst [vmem:[#allocation6 + $0x8] sm:$0xff] %v485
          %v488 = vld [vmem:[%s1] sm:$0xf]
          %v489 = vld [vmem:[%s1 + $0x4] sm:$0xf]
          %v490 = vld [vmem:[#allocation12] sm:$0xff]
          %v491 = vld [vmem:[#allocation12 + $0x8] sm:$0xff]
          %v492 = vld [vmem:[%s7] sm:$0xf]
          %v494 = vperm.slane %v492, 0
          %v495 = vperm.slane %v492, 1
          %v496 = vperm.slane %v492, 2
          %v497 = vperm.slane %v492, 3
          %v504 = vunpack.c.l.b16 %v488
          %v505 = vunpack.c.l.b16 %v489
          %v506 = vpack.c.b16 %v505, %v504
          %v509 = vunpack.c.l.b16 %v490
          %v510 = vunpack.c.h.b16 %v490
          %v511 = vunpack.c.l.b16 %v491
          %v512 = vunpack.c.h.b16 %v491
          %v513 = vpack.c.b16 %v509, %v509
          %v514 = vpack.c.b16 %v510, %v510
          %v515 = vpack.c.b16 %v511, %v511
          %v516 = vpack.c.b16 %v512, %v512
          %vm517 = vcmask 64512
          %v519 = vsel %vm517, %v506, 0
          %vm521 = vcmask 1043456
          %v523 = vsel %vm521, %v513, 0
          %v526 = vsel %vm521, %v514, 0
          %v529 = vsel %vm521, %v515, 0
          %v532 = vsel %vm521, %v516, 0
          %534 = vmatpush.bf16.msra.mxu0 0
          %535 = vmatpush.bf16.msra.mxu0 0
          %536 = vmatpush.bf16.msra.mxu0 0
          %537 = vmatpush.bf16.msra.mxu0 0
          %538 = vmatpush.bf16.msra.mxu0 0
          %539 = vmatpush.bf16.msra.mxu0 0
          %540 = vmatpush.bf16.msra.mxu0 0
          %541 = vmatpush.bf16.msra.mxu0 %v523
          %542 = vmatmul.bf16.gmra.mxu0 %v519
          %v543 = vpop.f32.mrf.mxu0
          %v544 = vadd.f32 %v494, %v543
          %v545 = vpop.f32.mrf.mxu0
          %v546 = vadd.f32 %v494, %v545
          %547 = vdwg.mxu0
          %548 = vmatpush.bf16.msra.mxu0 0
          %549 = vmatpush.bf16.msra.mxu0 0
          %550 = vmatpush.bf16.msra.mxu0 0
          %551 = vmatpush.bf16.msra.mxu0 0
          %552 = vmatpush.bf16.msra.mxu0 0
          %553 = vmatpush.bf16.msra.mxu0 0
          %554 = vmatpush.bf16.msra.mxu0 0
          %555 = vmatpush.bf16.msra.mxu0 %v526
          %556 = vmatmul.bf16.gmra.mxu0 %v519
          %v557 = vpop.f32.mrf.mxu0
          %v558 = vadd.f32 %v495, %v557
          %v559 = vpop.f32.mrf.mxu0
          %v560 = vadd.f32 %v495, %v559
          %561 = vdwg.mxu0
          %562 = vmatpush.bf16.msra.mxu0 0
          %563 = vmatpush.bf16.msra.mxu0 0
          %564 = vmatpush.bf16.msra.mxu0 0
          %565 = vmatpush.bf16.msra.mxu0 0
          %566 = vmatpush.bf16.msra.mxu0 0
          %567 = vmatpush.bf16.msra.mxu0 0
          %568 = vmatpush.bf16.msra.mxu0 0
          %569 = vmatpush.bf16.msra.mxu0 %v529
          %570 = vmatmul.bf16.gmra.mxu0 %v519
          %v571 = vpop.f32.mrf.mxu0
          %v572 = vadd.f32 %v496, %v571
          %v573 = vpop.f32.mrf.mxu0
          %v574 = vadd.f32 %v496, %v573
          %575 = vdwg.mxu0
          %576 = vmatpush.bf16.msra.mxu0 0
          %577 = vmatpush.bf16.msra.mxu0 0
          %578 = vmatpush.bf16.msra.mxu0 0
          %579 = vmatpush.bf16.msra.mxu0 0
          %580 = vmatpush.bf16.msra.mxu0 0
          %581 = vmatpush.bf16.msra.mxu0 0
          %582 = vmatpush.bf16.msra.mxu0 0
          %583 = vmatpush.bf16.msra.mxu0 %v532
          %584 = vmatmul.bf16.gmra.mxu0 %v519
          %v585 = vpop.f32.mrf.mxu0
          %v586 = vadd.f32 %v497, %v585
          %v587 = vpop.f32.mrf.mxu0
          %v588 = vadd.f32 %v497, %v587
          %589 = vdwg.mxu0
          %590 = vst [vmem:[#allocation4] sm:$0xff] %v544
          %591 = vst [vmem:[#allocation4 + $0x8] sm:$0xff] %v558
          %592 = vst [vmem:[#allocation4 + $0x10] sm:$0xff] %v572
          %593 = vst [vmem:[#allocation4 + $0x18] sm:$0xff] %v586
          %594 = vst [vmem:[#allocation4 + $0x20] sm:$0xff] %v546
          %595 = vst [vmem:[#allocation4 + $0x28] sm:$0xff] %v560
          %596 = vst [vmem:[#allocation4 + $0x30] sm:$0xff] %v574
          %597 = vst [vmem:[#allocation4 + $0x38] sm:$0xff] %v588
        $region80: #{tpu_custom_call.1} parent=59 // pred_fallthru
          _
        %v598 = vld [vmem:[%s471] sm:$0xf]
        %v599 = vld [vmem:[%s471 + $0x4] sm:$0xf]
        %v600 = vld [vmem:[%s471 + $0x8] sm:$0xf]
        %v601 = vld [vmem:[%s471 + $0xc] sm:$0xf]
        %v602 = vld [vmem:[%s471 + $0x10] sm:$0xf]
        %v603 = vld [vmem:[%s471 + $0x14] sm:$0xf]
        %v604 = vld [vmem:[#allocation10] sm:$0xff]
        %v605 = vld [vmem:[#allocation10 + $0x8] sm:$0xff]
        %v606 = vld [vmem:[#allocation4] sm:$0xff]
        %v607 = vld [vmem:[#allocation4 + $0x8] sm:$0xff]
        %v608 = vld [vmem:[#allocation4 + $0x10] sm:$0xff]
        %v609 = vld [vmem:[#allocation4 + $0x18] sm:$0xff]
        %v610 = vld [vmem:[#allocation4 + $0x20] sm:$0xff]
        %v611 = vld [vmem:[#allocation4 + $0x28] sm:$0xff]
        %v612 = vld [vmem:[#allocation4 + $0x30] sm:$0xff]
        %v613 = vld [vmem:[#allocation4 + $0x38] sm:$0xff]
        %v620 = vunpack.c.l.b16 %v598
        %v621 = vunpack.c.l.b16 %v599
        %v622 = vunpack.c.l.b16 %v600
        %v623 = vunpack.c.l.b16 %v601
        %v624 = vunpack.c.l.b16 %v602
        %v625 = vunpack.c.l.b16 %v603
        %v626 = vpack.c.b16 %v621, %v620
        %v627 = vpack.c.b16 %v623, %v622
        %v628 = vpack.c.b16 %v625, %v624
        %v631 = vunpack.c.l.b16 %v604
        %v632 = vunpack.c.h.b16 %v604
        %v633 = vunpack.c.l.b16 %v605
        %v634 = vunpack.c.h.b16 %v605
        %v635 = vpack.c.b16 %v631, %v631
        %v636 = vpack.c.b16 %v632, %v632
        %v637 = vpack.c.b16 %v633, %v633
        %v638 = vpack.c.b16 %v634, %v634
        %vm639 = vcmask 64512
        %v641 = vsel %vm639, %v626, 0
        %v644 = vsel %vm639, %v627, 0
        %v647 = vsel %vm639, %v628, 0
        %vm649 = vcmask 1043456
        %v651 = vsel %vm649, %v635, 0
        %v654 = vsel %vm649, %v636, 0
        %v657 = vsel %vm649, %v637, 0
        %v660 = vsel %vm649, %v638, 0
        %662 = vmatpush.bf16.msra.mxu0 0
        %663 = vmatpush.bf16.msra.mxu0 0
        %664 = vmatpush.bf16.msra.mxu0 0
        %665 = vmatpush.bf16.msra.mxu0 0
        %666 = vmatpush.bf16.msra.mxu0 0
        %667 = vmatpush.bf16.msra.mxu0 0
        %668 = vmatpush.bf16.msra.mxu0 0
        %669 = vmatpush.bf16.msra.mxu0 %v651
        %670 = vmatmul.bf16.gmra.mxu0 %v641
        %v671 = vpop.f32.mrf.mxu0
        %v672 = vadd.f32 %v606, %v671
        %v673 = vpop.f32.mrf.mxu0
        %v674 = vadd.f32 %v610, %v673
        %675 = vmatmul.bf16.gmra.mxu0 %v644
        %v676 = vpop.f32.mrf.mxu0
        %v677 = vadd.f32 %v606, %v676
        %v678 = vpop.f32.mrf.mxu0
        %v679 = vadd.f32 %v610, %v678
        %680 = vmatmul.bf16.gmra.mxu0 %v647
        %v681 = vpop.f32.mrf.mxu0
        %v682 = vadd.f32 %v606, %v681
        %v683 = vpop.f32.mrf.mxu0
        %v684 = vadd.f32 %v610, %v683
        %685 = vdwg.mxu0
        %686 = vmatpush.bf16.msra.mxu0 0
        %687 = vmatpush.bf16.msra.mxu0 0
        %688 = vmatpush.bf16.msra.mxu0 0
        %689 = vmatpush.bf16.msra.mxu0 0
        %690 = vmatpush.bf16.msra.mxu0 0
        %691 = vmatpush.bf16.msra.mxu0 0
        %692 = vmatpush.bf16.msra.mxu0 0
        %693 = vmatpush.bf16.msra.mxu0 %v654
        %694 = vmatmul.bf16.gmra.mxu0 %v641
        %v695 = vpop.f32.mrf.mxu0
        %v696 = vadd.f32 %v607, %v695
        %v697 = vpop.f32.mrf.mxu0
        %v698 = vadd.f32 %v611, %v697
        %699 = vmatmul.bf16.gmra.mxu0 %v644
        %v700 = vpop.f32.mrf.mxu0
        %v701 = vadd.f32 %v607, %v700
        %v702 = vpop.f32.mrf.mxu0
        %v703 = vadd.f32 %v611, %v702
        %704 = vmatmul.bf16.gmra.mxu0 %v647
        %v705 = vpop.f32.mrf.mxu0
        %v706 = vadd.f32 %v607, %v705
        %v707 = vpop.f32.mrf.mxu0
        %v708 = vadd.f32 %v611, %v707
        %709 = vdwg.mxu0
        %710 = vmatpush.bf16.msra.mxu0 0
        %711 = vmatpush.bf16.msra.mxu0 0
        %712 = vmatpush.bf16.msra.mxu0 0
        %713 = vmatpush.bf16.msra.mxu0 0
        %714 = vmatpush.bf16.msra.mxu0 0
        %715 = vmatpush.bf16.msra.mxu0 0
        %716 = vmatpush.bf16.msra.mxu0 0
        %717 = vmatpush.bf16.msra.mxu0 %v657
        %718 = vmatmul.bf16.gmra.mxu0 %v641
        %v719 = vpop.f32.mrf.mxu0
        %v720 = vadd.f32 %v608, %v719
        %v721 = vpop.f32.mrf.mxu0
        %v722 = vadd.f32 %v612, %v721
        %723 = vmatmul.bf16.gmra.mxu0 %v644
        %v724 = vpop.f32.mrf.mxu0
        %v725 = vadd.f32 %v608, %v724
        %v726 = vpop.f32.mrf.mxu0
        %v727 = vadd.f32 %v612, %v726
        %728 = vmatmul.bf16.gmra.mxu0 %v647
        %v729 = vpop.f32.mrf.mxu0
        %v730 = vadd.f32 %v608, %v729
        %v731 = vpop.f32.mrf.mxu0
        %v732 = vadd.f32 %v612, %v731
        %733 = vdwg.mxu0
        %734 = vmatpush.bf16.msra.mxu0 0
        %735 = vmatpush.bf16.msra.mxu0 0
        %736 = vmatpush.bf16.msra.mxu0 0
        %737 = vmatpush.bf16.msra.mxu0 0
        %738 = vmatpush.bf16.msra.mxu0 0
        %739 = vmatpush.bf16.msra.mxu0 0
        %740 = vmatpush.bf16.msra.mxu0 0
        %741 = vmatpush.bf16.msra.mxu0 %v660
        %742 = vmatmul.bf16.gmra.mxu0 %v641
        %v743 = vpop.f32.mrf.mxu0
        %v744 = vadd.f32 %v609, %v743
        %v745 = vpop.f32.mrf.mxu0
        %v746 = vadd.f32 %v613, %v745
        %747 = vmatmul.bf16.gmra.mxu0 %v644
        %v748 = vpop.f32.mrf.mxu0
        %v749 = vadd.f32 %v609, %v748
        %v750 = vpop.f32.mrf.mxu0
        %v751 = vadd.f32 %v613, %v750
        %752 = vmatmul.bf16.gmra.mxu0 %v647
        %v753 = vpop.f32.mrf.mxu0
        %v754 = vadd.f32 %v609, %v753
        %v755 = vpop.f32.mrf.mxu0
        %v756 = vadd.f32 %v613, %v755
        %757 = vdwg.mxu0
        %758 = vst [vmem:[#allocation2] sm:$0xff] %v672
        %759 = vst [vmem:[#allocation2 + $0x8] sm:$0xff] %v696
        %760 = vst [vmem:[#allocation2 + $0x10] sm:$0xff] %v720
        %761 = vst [vmem:[#allocation2 + $0x18] sm:$0xff] %v744
        %762 = vst [vmem:[#allocation2 + $0x20] sm:$0xff] %v674
        %763 = vst [vmem:[#allocation2 + $0x28] sm:$0xff] %v698
        %764 = vst [vmem:[#allocation2 + $0x30] sm:$0xff] %v722
        %765 = vst [vmem:[#allocation2 + $0x38] sm:$0xff] %v746
        %766 = vst [vmem:[#allocation2 + $0x40] sm:$0xff] %v677
        %767 = vst [vmem:[#allocation2 + $0x48] sm:$0xff] %v701
        %768 = vst [vmem:[#allocation2 + $0x50] sm:$0xff] %v725
        %769 = vst [vmem:[#allocation2 + $0x58] sm:$0xff] %v749
        %770 = vst [vmem:[#allocation2 + $0x60] sm:$0xff] %v679
        %771 = vst [vmem:[#allocation2 + $0x68] sm:$0xff] %v703
        %772 = vst [vmem:[#allocation2 + $0x70] sm:$0xff] %v727
        %773 = vst [vmem:[#allocation2 + $0x78] sm:$0xff] %v751
        %774 = vst [vmem:[#allocation2 + $0x80] sm:$0xff] %v682
        %775 = vst [vmem:[#allocation2 + $0x88] sm:$0xff] %v706
        %776 = vst [vmem:[#allocation2 + $0x90] sm:$0xff] %v730
        %777 = vst [vmem:[#allocation2 + $0x98] sm:$0xff] %v754
        %778 = vst [vmem:[#allocation2 + $0xa0] sm:$0xff] %v684
        %779 = vst [vmem:[#allocation2 + $0xa8] sm:$0xff] %v708
        %780 = vst [vmem:[#allocation2 + $0xb0] sm:$0xff] %v732
        %781 = vst [vmem:[#allocation2 + $0xb8] sm:$0xff] %v756
        %s782 = smul.u32 0, 4
        %s783 = smul.addr %s782, 8
        %s784 = scalar_lea.vmem [#allocation2], %s783
        %v785 = vld [vmem:[%s784] sm:$0xff]
        %v786 = vld [vmem:[%s784 + $0x8] sm:$0xff]
        %v787 = vld [vmem:[%s784 + $0x10] sm:$0xff]
        %v788 = vld [vmem:[%s784 + $0x18] sm:$0xff]
        %v789 = vld [vmem:[%s784 + $0x20] sm:$0xff]
        %v790 = vld [vmem:[%s784 + $0x28] sm:$0xff]
        %v791 = vld [vmem:[%s784 + $0x30] sm:$0xff]
        %v792 = vld [vmem:[%s784 + $0x38] sm:$0xff]
        %v793 = vld [vmem:[#allocation5] sm:$0xff]
        %v794 = vld [vmem:[#allocation5 + $0x8] sm:$0xff]
        %v795 = vpack.c.bf16 %v794, %v793
        %v796 = vld [vmem:[#allocation13] sm:$0xff]
        %v797 = vld [vmem:[#allocation13 + $0x8] sm:$0xff]
        %v798 = vld [vmem:[#allocation13 + $0x10] sm:$0xff]
        %v799 = vld [vmem:[#allocation13 + $0x18] sm:$0xff]
        %v800 = vld [vmem:[#allocation13 + $0x20] sm:$0xff]
        %v801 = vld [vmem:[#allocation13 + $0x28] sm:$0xff]
        %v802 = vld [vmem:[#allocation13 + $0x30] sm:$0xff]
        %v803 = vld [vmem:[#allocation13 + $0x38] sm:$0xff]
        %v804 = vld [vmem:[#allocation13 + $0x40] sm:$0xff]
        %v805 = vld [vmem:[#allocation13 + $0x48] sm:$0xff]
        %v806 = vld [vmem:[#allocation13 + $0x50] sm:$0xff]
        %v807 = vld [vmem:[#allocation13 + $0x58] sm:$0xff]
        %v808 = vld [vmem:[#allocation13 + $0x60] sm:$0xff]
        %v809 = vld [vmem:[#allocation13 + $0x68] sm:$0xff]
        %v810 = vld [vmem:[#allocation13 + $0x70] sm:$0xff]
        %v811 = vld [vmem:[#allocation13 + $0x78] sm:$0xff]
        %v812 = vld [vmem:[#allocation13 + $0x80] sm:$0xff]
        %v813 = vld [vmem:[#allocation13 + $0x88] sm:$0xff]
        %v814 = vld [vmem:[#allocation13 + $0x90] sm:$0xff]
        %v815 = vld [vmem:[#allocation13 + $0x98] sm:$0xff]
        %v816 = vld [vmem:[#allocation13 + $0xa0] sm:$0xff]
        %v817 = vld [vmem:[#allocation13 + $0xa8] sm:$0xff]
        %v818 = vld [vmem:[#allocation13 + $0xb0] sm:$0xff]
        %v819 = vld [vmem:[#allocation13 + $0xb8] sm:$0xff]
        %v820 = vld [vmem:[#allocation13 + $0xc0] sm:$0xff]
        %v821 = vld [vmem:[#allocation13 + $0xc8] sm:$0xff]
        %v822 = vld [vmem:[#allocation13 + $0xd0] sm:$0xff]
        %v823 = vld [vmem:[#allocation13 + $0xd8] sm:$0xff]
        %v824 = vld [vmem:[#allocation13 + $0xe0] sm:$0xff]
        %v825 = vld [vmem:[#allocation13 + $0xe8] sm:$0xff]
        %v826 = vld [vmem:[#allocation13 + $0xf0] sm:$0xff]
        %v827 = vld [vmem:[#allocation13 + $0xf8] sm:$0xff]
        %v860 = vunpack.c.l.b16 %v796
        %v861 = vunpack.c.h.b16 %v796
        %v862 = vunpack.c.l.b16 %v797
        %v863 = vunpack.c.h.b16 %v797
        %v864 = vunpack.c.l.b16 %v798
        %v865 = vunpack.c.h.b16 %v798
        %v866 = vunpack.c.l.b16 %v799
        %v867 = vunpack.c.h.b16 %v799
        %v868 = vunpack.c.l.b16 %v800
        %v869 = vunpack.c.h.b16 %v800
        %v870 = vunpack.c.l.b16 %v801
        %v871 = vunpack.c.h.b16 %v801
        %v872 = vunpack.c.l.b16 %v802
        %v873 = vunpack.c.h.b16 %v802
        %v874 = vunpack.c.l.b16 %v803
        %v875 = vunpack.c.h.b16 %v803
        %v876 = vunpack.c.l.b16 %v804
        %v877 = vunpack.c.h.b16 %v804
        %v878 = vunpack.c.l.b16 %v805
        %v879 = vunpack.c.h.b16 %v805
        %v880 = vunpack.c.l.b16 %v806
        %v881 = vunpack.c.h.b16 %v806
        %v882 = vunpack.c.l.b16 %v807
        %v883 = vunpack.c.h.b16 %v807
        %v884 = vunpack.c.l.b16 %v808
        %v885 = vunpack.c.h.b16 %v808
        %v886 = vunpack.c.l.b16 %v809
        %v887 = vunpack.c.h.b16 %v809
        %v888 = vunpack.c.l.b16 %v810
        %v889 = vunpack.c.h.b16 %v810
        %v890 = vunpack.c.l.b16 %v811
        %v891 = vunpack.c.h.b16 %v811
        %v892 = vunpack.c.l.b16 %v812
        %v893 = vunpack.c.h.b16 %v812
        %v894 = vunpack.c.l.b16 %v813
        %v895 = vunpack.c.h.b16 %v813
        %v896 = vunpack.c.l.b16 %v814
        %v897 = vunpack.c.h.b16 %v814
        %v898 = vunpack.c.l.b16 %v815
        %v899 = vunpack.c.h.b16 %v815
        %v900 = vunpack.c.l.b16 %v816
        %v901 = vunpack.c.h.b16 %v816
        %v902 = vunpack.c.l.b16 %v817
        %v903 = vunpack.c.h.b16 %v817
        %v904 = vunpack.c.l.b16 %v818
        %v905 = vunpack.c.h.b16 %v818
        %v906 = vunpack.c.l.b16 %v819
        %v907 = vunpack.c.h.b16 %v819
        %v908 = vunpack.c.l.b16 %v820
        %v909 = vunpack.c.h.b16 %v820
        %v910 = vunpack.c.l.b16 %v821
        %v911 = vunpack.c.h.b16 %v821
        %v912 = vunpack.c.l.b16 %v822
        %v913 = vunpack.c.h.b16 %v822
        %v914 = vunpack.c.l.b16 %v823
        %v915 = vunpack.c.h.b16 %v823
        %v916 = vunpack.c.l.b16 %v824
        %v917 = vunpack.c.h.b16 %v824
        %v918 = vunpack.c.l.b16 %v825
        %v919 = vunpack.c.h.b16 %v825
        %v920 = vunpack.c.l.b16 %v826
        %v921 = vunpack.c.h.b16 %v826
        %v922 = vunpack.c.l.b16 %v827
        %v923 = vunpack.c.h.b16 %v827
        %v924 = vpack.c.b16 %v864, %v860
        %v925 = vpack.c.b16 %v865, %v861
        %v926 = vpack.c.b16 %v866, %v862
        %v927 = vpack.c.b16 %v867, %v863
        %v928 = vpack.c.b16 %v872, %v868
        %v929 = vpack.c.b16 %v873, %v869
        %v930 = vpack.c.b16 %v874, %v870
        %v931 = vpack.c.b16 %v875, %v871
        %v932 = vpack.c.b16 %v880, %v876
        %v933 = vpack.c.b16 %v881, %v877
        %v934 = vpack.c.b16 %v882, %v878
        %v935 = vpack.c.b16 %v883, %v879
        %v936 = vpack.c.b16 %v888, %v884
        %v937 = vpack.c.b16 %v889, %v885
        %v938 = vpack.c.b16 %v890, %v886
        %v939 = vpack.c.b16 %v891, %v887
        %v940 = vpack.c.b16 %v896, %v892
        %v941 = vpack.c.b16 %v897, %v893
        %v942 = vpack.c.b16 %v898, %v894
        %v943 = vpack.c.b16 %v899, %v895
        %v944 = vpack.c.b16 %v904, %v900
        %v945 = vpack.c.b16 %v905, %v901
        %v946 = vpack.c.b16 %v906, %v902
        %v947 = vpack.c.b16 %v907, %v903
        %v948 = vpack.c.b16 %v912, %v908
        %v949 = vpack.c.b16 %v913, %v909
        %v950 = vpack.c.b16 %v914, %v910
        %v951 = vpack.c.b16 %v915, %v911
        %v952 = vpack.c.b16 %v920, %v916
        %v953 = vpack.c.b16 %v921, %v917
        %v954 = vpack.c.b16 %v922, %v918
        %v955 = vpack.c.b16 %v923, %v919
        %988 = vmatpush.bf16.msra.mxu0 %v952
        %989 = vmatpush.bf16.msra.mxu0 %v948
        %990 = vmatpush.bf16.msra.mxu0 %v944
        %991 = vmatpush.bf16.msra.mxu0 %v940
        %992 = vmatpush.bf16.msra.mxu0 %v936
        %993 = vmatpush.bf16.msra.mxu0 %v932
        %994 = vmatpush.bf16.msra.mxu0 %v928
        %995 = vmatpush.bf16.msra.mxu0 %v924
        %996 = vmatmul.bf16.gmra.mxu0 %v795
        %v997 = vpop.f32.mrf.mxu0
        %v998 = vadd.f32 0.0, %v997
        %v999 = vpop.f32.mrf.mxu0
        %v1000 = vadd.f32 0.0, %v999
        %1001 = vdwg.mxu0
        %1002 = vmatpush.bf16.msra.mxu0 %v953
        %1003 = vmatpush.bf16.msra.mxu0 %v949
        %1004 = vmatpush.bf16.msra.mxu0 %v945
        %1005 = vmatpush.bf16.msra.mxu0 %v941
        %1006 = vmatpush.bf16.msra.mxu0 %v937
        %1007 = vmatpush.bf16.msra.mxu0 %v933
        %1008 = vmatpush.bf16.msra.mxu0 %v929
        %1009 = vmatpush.bf16.msra.mxu0 %v925
        %1010 = vmatmul.bf16.gmra.mxu0 %v795
        %v1011 = vpop.f32.mrf.mxu0
        %v1012 = vadd.f32 0.0, %v1011
        %v1013 = vpop.f32.mrf.mxu0
        %v1014 = vadd.f32 0.0, %v1013
        %1015 = vdwg.mxu0
        %1016 = vmatpush.bf16.msra.mxu0 %v954
        %1017 = vmatpush.bf16.msra.mxu0 %v950
        %1018 = vmatpush.bf16.msra.mxu0 %v946
        %1019 = vmatpush.bf16.msra.mxu0 %v942
        %1020 = vmatpush.bf16.msra.mxu0 %v938
        %1021 = vmatpush.bf16.msra.mxu0 %v934
        %1022 = vmatpush.bf16.msra.mxu0 %v930
        %1023 = vmatpush.bf16.msra.mxu0 %v926
        %1024 = vmatmul.bf16.gmra.mxu0 %v795
        %v1025 = vpop.f32.mrf.mxu0
        %v1026 = vadd.f32 0.0, %v1025
        %v1027 = vpop.f32.mrf.mxu0
        %v1028 = vadd.f32 0.0, %v1027
        %1029 = vdwg.mxu0
        %1030 = vmatpush.bf16.msra.mxu0 %v955
        %1031 = vmatpush.bf16.msra.mxu0 %v951
        %1032 = vmatpush.bf16.msra.mxu0 %v947
        %1033 = vmatpush.bf16.msra.mxu0 %v943
        %1034 = vmatpush.bf16.msra.mxu0 %v939
        %1035 = vmatpush.bf16.msra.mxu0 %v935
        %1036 = vmatpush.bf16.msra.mxu0 %v931
        %1037 = vmatpush.bf16.msra.mxu0 %v927
        %1038 = vmatmul.bf16.gmra.mxu0 %v795
        %v1039 = vpop.f32.mrf.mxu0
        %v1040 = vadd.f32 0.0, %v1039
        %v1041 = vpop.f32.mrf.mxu0
        %v1042 = vadd.f32 0.0, %v1041
        %1043 = vdwg.mxu0
        %v1044 = vadd.f32 %v785, %v998
        %v1045 = vadd.f32 %v786, %v1012
        %v1046 = vadd.f32 %v787, %v1026
        %v1047 = vadd.f32 %v788, %v1040
        %v1048 = vadd.f32 %v789, %v1000
        %v1049 = vadd.f32 %v790, %v1014
        %v1050 = vadd.f32 %v791, %v1028
        %v1051 = vadd.f32 %v792, %v1042
        %v1052 = vxor.u32 %v1044, 2147483648
        %v1053 = vxor.u32 %v1048, 2147483648
        %v1054 = vmul.f32 %v1052, 1.442695
        %v1055 = vpow.pop %v1054
        %v1056 = vmul.f32 %v1053, 1.442695
        %v1057 = vpow.pop %v1056
        %v1058 = vadd.f32 %v1055, 1.0
        %v1059 = vadd.f32 %v1057, 1.0
        %v1060 = vrcp.pop %v1058
        %v1061 = vmul.f32 %v1058, %v1060
        %v1062 = vsub.f32 1.0, %v1061
        %v1063 = vmul.f32 %v1060, %v1062
        %v1064 = vadd.f32 %v1060, %v1063
        %vm1065 = vweird.f32 %v1058
        %vm1066 = vweird.f32 %v1060
        %vm1067 = vmor %vm1065, %vm1066
        %v1068 = vsel %vm1067, %v1060, %v1064
        %v1069 = vand.u32 2147483647, %v1058
        %vm1070 = vcmp.eq.f32.partialorder %v1069, 8.507059e+37
        %v1071 = vand.u32 %v1058, 2147483648
        %v1072 = vor.u32 1.1754944e-38, %v1071
        %v1073 = vsel %vm1070, %v1072, %v1068
        %v1074 = vmul.f32 1.0, %v1073
        %v1075 = vrcp.pop %v1059
        %v1076 = vmul.f32 %v1059, %v1075
        %v1077 = vsub.f32 1.0, %v1076
        %v1078 = vmul.f32 %v1075, %v1077
        %v1079 = vadd.f32 %v1075, %v1078
        %vm1080 = vweird.f32 %v1059
        %vm1081 = vweird.f32 %v1075
        %vm1082 = vmor %vm1080, %vm1081
        %v1083 = vsel %vm1082, %v1075, %v1079
        %v1084 = vand.u32 2147483647, %v1059
        %vm1085 = vcmp.eq.f32.partialorder %v1084, 8.507059e+37
        %v1086 = vand.u32 %v1059, 2147483648
        %v1087 = vor.u32 1.1754944e-38, %v1086
        %v1088 = vsel %vm1085, %v1087, %v1083
        %v1089 = vmul.f32 1.0, %v1088
        %v1090 = vxor.u32 %v1045, 2147483648
        %v1091 = vxor.u32 %v1049, 2147483648
        %v1092 = vmul.f32 %v1090, 1.442695
        %v1093 = vpow.pop %v1092
        %v1094 = vmul.f32 %v1091, 1.442695
        %v1095 = vpow.pop %v1094
        %v1096 = vadd.f32 %v1093, 1.0
        %v1097 = vadd.f32 %v1095, 1.0
        %v1098 = vrcp.pop %v1096
        %v1099 = vmul.f32 %v1096, %v1098
        %v1100 = vsub.f32 1.0, %v1099
        %v1101 = vmul.f32 %v1098, %v1100
        %v1102 = vadd.f32 %v1098, %v1101
        %vm1103 = vweird.f32 %v1096
        %vm1104 = vweird.f32 %v1098
        %vm1105 = vmor %vm1103, %vm1104
        %v1106 = vsel %vm1105, %v1098, %v1102
        %v1107 = vand.u32 2147483647, %v1096
        %vm1108 = vcmp.eq.f32.partialorder %v1107, 8.507059e+37
        %v1109 = vand.u32 %v1096, 2147483648
        %v1110 = vor.u32 1.1754944e-38, %v1109
        %v1111 = vsel %vm1108, %v1110, %v1106
        %v1112 = vmul.f32 1.0, %v1111
        %v1113 = vrcp.pop %v1097
        %v1114 = vmul.f32 %v1097, %v1113
        %v1115 = vsub.f32 1.0, %v1114
        %v1116 = vmul.f32 %v1113, %v1115
        %v1117 = vadd.f32 %v1113, %v1116
        %vm1118 = vweird.f32 %v1097
        %vm1119 = vweird.f32 %v1113
        %vm1120 = vmor %vm1118, %vm1119
        %v1121 = vsel %vm1120, %v1113, %v1117
        %v1122 = vand.u32 2147483647, %v1097
        %vm1123 = vcmp.eq.f32.partialorder %v1122, 8.507059e+37
        %v1124 = vand.u32 %v1097, 2147483648
        %v1125 = vor.u32 1.1754944e-38, %v1124
        %v1126 = vsel %vm1123, %v1125, %v1121
        %v1127 = vmul.f32 1.0, %v1126
        %v1128 = vtanh.pop %v1046
        %v1129 = vtanh.pop %v1050
        %v1130 = vxor.u32 %v1047, 2147483648
        %v1131 = vxor.u32 %v1051, 2147483648
        %v1132 = vmul.f32 %v1130, 1.442695
        %v1133 = vpow.pop %v1132
        %v1134 = vmul.f32 %v1131, 1.442695
        %v1135 = vpow.pop %v1134
        %v1136 = vadd.f32 %v1133, 1.0
        %v1137 = vadd.f32 %v1135, 1.0
        %v1138 = vrcp.pop %v1136
        %v1139 = vmul.f32 %v1136, %v1138
        %v1140 = vsub.f32 1.0, %v1139
        %v1141 = vmul.f32 %v1138, %v1140
        %v1142 = vadd.f32 %v1138, %v1141
        %vm1143 = vweird.f32 %v1136
        %vm1144 = vweird.f32 %v1138
        %vm1145 = vmor %vm1143, %vm1144
        %v1146 = vsel %vm1145, %v1138, %v1142
        %v1147 = vand.u32 2147483647, %v1136
        %vm1148 = vcmp.eq.f32.partialorder %v1147, 8.507059e+37
        %v1149 = vand.u32 %v1136, 2147483648
        %v1150 = vor.u32 1.1754944e-38, %v1149
        %v1151 = vsel %vm1148, %v1150, %v1146
        %v1152 = vmul.f32 1.0, %v1151
        %v1153 = vrcp.pop %v1137
        %v1154 = vmul.f32 %v1137, %v1153
        %v1155 = vsub.f32 1.0, %v1154
        %v1156 = vmul.f32 %v1153, %v1155
        %v1157 = vadd.f32 %v1153, %v1156
        %vm1158 = vweird.f32 %v1137
        %vm1159 = vweird.f32 %v1153
        %vm1160 = vmor %vm1158, %vm1159
        %v1161 = vsel %vm1160, %v1153, %v1157
        %v1162 = vand.u32 2147483647, %v1137
        %vm1163 = vcmp.eq.f32.partialorder %v1162, 8.507059e+37
        %v1164 = vand.u32 %v1137, 2147483648
        %v1165 = vor.u32 1.1754944e-38, %v1164
        %v1166 = vsel %vm1163, %v1165, %v1161
        %v1167 = vmul.f32 1.0, %v1166
        %v1168 = vld [vmem:[#allocation6] sm:$0xff]
        %v1169 = vld [vmem:[#allocation6 + $0x8] sm:$0xff]
        %v1170 = vmul.f32 %v1112, %v1168
        %v1171 = vmul.f32 %v1127, %v1169
        %v1172 = vmul.f32 %v1074, %v1128
        %v1173 = vmul.f32 %v1089, %v1129
        %v1174 = vadd.f32 %v1170, %v1172
        %v1175 = vadd.f32 %v1171, %v1173
        %v1176 = vtanh.pop %v1174
        %v1177 = vtanh.pop %v1175
        %v1178 = vmul.f32 %v1152, %v1176
        %v1179 = vmul.f32 %v1167, %v1177
        %v1180 = vpack.c.bf16 %v1178, %v1178
        %v1181 = vpack.c.bf16 %v1179, %v1179
        %1182 = vst [vmem:[#allocation3] sm:$0xf] %v1180
        %1183 = vst [vmem:[#allocation3 + $0x4] sm:$0xf] %v1181
        %p1184 = scmp.lt.s32.totalorder %s475, 8
        // Predicated region
        $region81: #{tpu_custom_call.1} parent=59 // pred_check
          %p1185 = pneg %p1184
        $region82: #{tpu_custom_call.1} parent=59 // pred_check_branch
          %1187 = sbr.rel (%p1185) target = $region84
        $region83: #{tpu_custom_call.1} parent=59 // pred_region
          %1188 = vst [vmem:[#allocation5] sm:$0xff] %v1178
          %1189 = vst [vmem:[#allocation5 + $0x8] sm:$0xff] %v1179
          %1190 = vst [vmem:[#allocation6] sm:$0xff] %v1174
          %1191 = vst [vmem:[#allocation6 + $0x8] sm:$0xff] %v1175
        $region84: #{tpu_custom_call.1} parent=59 // pred_fallthru
          _
        %s1192 = smul.u32 2, 4
        %s1193 = smul.addr %s1192, 8
        %s1194 = scalar_lea.vmem [#allocation2], %s1193
        %v1195 = vld [vmem:[%s1194] sm:$0xff]
        %v1196 = vld [vmem:[%s1194 + $0x8] sm:$0xff]
        %v1197 = vld [vmem:[%s1194 + $0x10] sm:$0xff]
        %v1198 = vld [vmem:[%s1194 + $0x18] sm:$0xff]
        %v1199 = vld [vmem:[%s1194 + $0x20] sm:$0xff]
        %v1200 = vld [vmem:[%s1194 + $0x28] sm:$0xff]
        %v1201 = vld [vmem:[%s1194 + $0x30] sm:$0xff]
        %v1202 = vld [vmem:[%s1194 + $0x38] sm:$0xff]
        %v1203 = vld [vmem:[#allocation5] sm:$0xff]
        %v1204 = vld [vmem:[#allocation5 + $0x8] sm:$0xff]
        %v1205 = vpack.c.bf16 %v1204, %v1203
        %v1206 = vld [vmem:[#allocation13] sm:$0xff]
        %v1207 = vld [vmem:[#allocation13 + $0x8] sm:$0xff]
        %v1208 = vld [vmem:[#allocation13 + $0x10] sm:$0xff]
        %v1209 = vld [vmem:[#allocation13 + $0x18] sm:$0xff]
        %v1210 = vld [vmem:[#allocation13 + $0x20] sm:$0xff]
        %v1211 = vld [vmem:[#allocation13 + $0x28] sm:$0xff]
        %v1212 = vld [vmem:[#allocation13 + $0x30] sm:$0xff]
        %v1213 = vld [vmem:[#allocation13 + $0x38] sm:$0xff]
        %v1214 = vld [vmem:[#allocation13 + $0x40] sm:$0xff]
        %v1215 = vld [vmem:[#allocation13 + $0x48] sm:$0xff]
        %v1216 = vld [vmem:[#allocation13 + $0x50] sm:$0xff]
        %v1217 = vld [vmem:[#allocation13 + $0x58] sm:$0xff]
        %v1218 = vld [vmem:[#allocation13 + $0x60] sm:$0xff]
        %v1219 = vld [vmem:[#allocation13 + $0x68] sm:$0xff]
        %v1220 = vld [vmem:[#allocation13 + $0x70] sm:$0xff]
        %v1221 = vld [vmem:[#allocation13 + $0x78] sm:$0xff]
        %v1222 = vld [vmem:[#allocation13 + $0x80] sm:$0xff]
        %v1223 = vld [vmem:[#allocation13 + $0x88] sm:$0xff]
        %v1224 = vld [vmem:[#allocation13 + $0x90] sm:$0xff]
        %v1225 = vld [vmem:[#allocation13 + $0x98] sm:$0xff]
        %v1226 = vld [vmem:[#allocation13 + $0xa0] sm:$0xff]
        %v1227 = vld [vmem:[#allocation13 + $0xa8] sm:$0xff]
        %v1228 = vld [vmem:[#allocation13 + $0xb0] sm:$0xff]
        %v1229 = vld [vmem:[#allocation13 + $0xb8] sm:$0xff]
        %v1230 = vld [vmem:[#allocation13 + $0xc0] sm:$0xff]
        %v1231 = vld [vmem:[#allocation13 + $0xc8] sm:$0xff]
        %v1232 = vld [vmem:[#allocation13 + $0xd0] sm:$0xff]
        %v1233 = vld [vmem:[#allocation13 + $0xd8] sm:$0xff]
        %v1234 = vld [vmem:[#allocation13 + $0xe0] sm:$0xff]
        %v1235 = vld [vmem:[#allocation13 + $0xe8] sm:$0xff]
        %v1236 = vld [vmem:[#allocation13 + $0xf0] sm:$0xff]
        %v1237 = vld [vmem:[#allocation13 + $0xf8] sm:$0xff]
        %v1270 = vunpack.c.l.b16 %v1206
        %v1271 = vunpack.c.h.b16 %v1206
        %v1272 = vunpack.c.l.b16 %v1207
        %v1273 = vunpack.c.h.b16 %v1207
        %v1274 = vunpack.c.l.b16 %v1208
        %v1275 = vunpack.c.h.b16 %v1208
        %v1276 = vunpack.c.l.b16 %v1209
        %v1277 = vunpack.c.h.b16 %v1209
        %v1278 = vunpack.c.l.b16 %v1210
        %v1279 = vunpack.c.h.b16 %v1210
        %v1280 = vunpack.c.l.b16 %v1211
        %v1281 = vunpack.c.h.b16 %v1211
        %v1282 = vunpack.c.l.b16 %v1212
        %v1283 = vunpack.c.h.b16 %v1212
        %v1284 = vunpack.c.l.b16 %v1213
        %v1285 = vunpack.c.h.b16 %v1213
        %v1286 = vunpack.c.l.b16 %v1214
        %v1287 = vunpack.c.h.b16 %v1214
        %v1288 = vunpack.c.l.b16 %v1215
        %v1289 = vunpack.c.h.b16 %v1215
        %v1290 = vunpack.c.l.b16 %v1216
        %v1291 = vunpack.c.h.b16 %v1216
        %v1292 = vunpack.c.l.b16 %v1217
        %v1293 = vunpack.c.h.b16 %v1217
        %v1294 = vunpack.c.l.b16 %v1218
        %v1295 = vunpack.c.h.b16 %v1218
        %v1296 = vunpack.c.l.b16 %v1219
        %v1297 = vunpack.c.h.b16 %v1219
        %v1298 = vunpack.c.l.b16 %v1220
        %v1299 = vunpack.c.h.b16 %v1220
        %v1300 = vunpack.c.l.b16 %v1221
        %v1301 = vunpack.c.h.b16 %v1221
        %v1302 = vunpack.c.l.b16 %v1222
        %v1303 = vunpack.c.h.b16 %v1222
        %v1304 = vunpack.c.l.b16 %v1223
        %v1305 = vunpack.c.h.b16 %v1223
        %v1306 = vunpack.c.l.b16 %v1224
        %v1307 = vunpack.c.h.b16 %v1224
        %v1308 = vunpack.c.l.b16 %v1225
        %v1309 = vunpack.c.h.b16 %v1225
        %v1310 = vunpack.c.l.b16 %v1226
        %v1311 = vunpack.c.h.b16 %v1226
        %v1312 = vunpack.c.l.b16 %v1227
        %v1313 = vunpack.c.h.b16 %v1227
        %v1314 = vunpack.c.l.b16 %v1228
        %v1315 = vunpack.c.h.b16 %v1228
        %v1316 = vunpack.c.l.b16 %v1229
        %v1317 = vunpack.c.h.b16 %v1229
        %v1318 = vunpack.c.l.b16 %v1230
        %v1319 = vunpack.c.h.b16 %v1230
        %v1320 = vunpack.c.l.b16 %v1231
        %v1321 = vunpack.c.h.b16 %v1231
        %v1322 = vunpack.c.l.b16 %v1232
        %v1323 = vunpack.c.h.b16 %v1232
        %v1324 = vunpack.c.l.b16 %v1233
        %v1325 = vunpack.c.h.b16 %v1233
        %v1326 = vunpack.c.l.b16 %v1234
        %v1327 = vunpack.c.h.b16 %v1234
        %v1328 = vunpack.c.l.b16 %v1235
        %v1329 = vunpack.c.h.b16 %v1235
        %v1330 = vunpack.c.l.b16 %v1236
        %v1331 = vunpack.c.h.b16 %v1236
        %v1332 = vunpack.c.l.b16 %v1237
        %v1333 = vunpack.c.h.b16 %v1237
        %v1334 = vpack.c.b16 %v1274, %v1270
        %v1335 = vpack.c.b16 %v1275, %v1271
        %v1336 = vpack.c.b16 %v1276, %v1272
        %v1337 = vpack.c.b16 %v1277, %v1273
        %v1338 = vpack.c.b16 %v1282, %v1278
        %v1339 = vpack.c.b16 %v1283, %v1279
        %v1340 = vpack.c.b16 %v1284, %v1280
        %v1341 = vpack.c.b16 %v1285, %v1281
        %v1342 = vpack.c.b16 %v1290, %v1286
        %v1343 = vpack.c.b16 %v1291, %v1287
        %v1344 = vpack.c.b16 %v1292, %v1288
        %v1345 = vpack.c.b16 %v1293, %v1289
        %v1346 = vpack.c.b16 %v1298, %v1294
        %v1347 = vpack.c.b16 %v1299, %v1295
        %v1348 = vpack.c.b16 %v1300, %v1296
        %v1349 = vpack.c.b16 %v1301, %v1297
        %v1350 = vpack.c.b16 %v1306, %v1302
        %v1351 = vpack.c.b16 %v1307, %v1303
        %v1352 = vpack.c.b16 %v1308, %v1304
        %v1353 = vpack.c.b16 %v1309, %v1305
        %v1354 = vpack.c.b16 %v1314, %v1310
        %v1355 = vpack.c.b16 %v1315, %v1311
        %v1356 = vpack.c.b16 %v1316, %v1312
        %v1357 = vpack.c.b16 %v1317, %v1313
        %v1358 = vpack.c.b16 %v1322, %v1318
        %v1359 = vpack.c.b16 %v1323, %v1319
        %v1360 = vpack.c.b16 %v1324, %v1320
        %v1361 = vpack.c.b16 %v1325, %v1321
        %v1362 = vpack.c.b16 %v1330, %v1326
        %v1363 = vpack.c.b16 %v1331, %v1327
        %v1364 = vpack.c.b16 %v1332, %v1328
        %v1365 = vpack.c.b16 %v1333, %v1329
        %1398 = vmatpush.bf16.msra.mxu0 %v1362
        %1399 = vmatpush.bf16.msra.mxu0 %v1358
        %1400 = vmatpush.bf16.msra.mxu0 %v1354
        %1401 = vmatpush.bf16.msra.mxu0 %v1350
        %1402 = vmatpush.bf16.msra.mxu0 %v1346
        %1403 = vmatpush.bf16.msra.mxu0 %v1342
        %1404 = vmatpush.bf16.msra.mxu0 %v1338
        %1405 = vmatpush.bf16.msra.mxu0 %v1334
        %1406 = vmatmul.bf16.gmra.mxu0 %v1205
        %v1407 = vpop.f32.mrf.mxu0
        %v1408 = vadd.f32 0.0, %v1407
        %v1409 = vpop.f32.mrf.mxu0
        %v1410 = vadd.f32 0.0, %v1409
        %1411 = vdwg.mxu0
        %1412 = vmatpush.bf16.msra.mxu0 %v1363
        %1413 = vmatpush.bf16.msra.mxu0 %v1359
        %1414 = vmatpush.bf16.msra.mxu0 %v1355
        %1415 = vmatpush.bf16.msra.mxu0 %v1351
        %1416 = vmatpush.bf16.msra.mxu0 %v1347
        %1417 = vmatpush.bf16.msra.mxu0 %v1343
        %1418 = vmatpush.bf16.msra.mxu0 %v1339
        %1419 = vmatpush.bf16.msra.mxu0 %v1335
        %1420 = vmatmul.bf16.gmra.mxu0 %v1205
        %v1421 = vpop.f32.mrf.mxu0
        %v1422 = vadd.f32 0.0, %v1421
        %v1423 = vpop.f32.mrf.mxu0
        %v1424 = vadd.f32 0.0, %v1423
        %1425 = vdwg.mxu0
        %1426 = vmatpush.bf16.msra.mxu0 %v1364
        %1427 = vmatpush.bf16.msra.mxu0 %v1360
        %1428 = vmatpush.bf16.msra.mxu0 %v1356
        %1429 = vmatpush.bf16.msra.mxu0 %v1352
        %1430 = vmatpush.bf16.msra.mxu0 %v1348
        %1431 = vmatpush.bf16.msra.mxu0 %v1344
        %1432 = vmatpush.bf16.msra.mxu0 %v1340
        %1433 = vmatpush.bf16.msra.mxu0 %v1336
        %1434 = vmatmul.bf16.gmra.mxu0 %v1205
        %v1435 = vpop.f32.mrf.mxu0
        %v1436 = vadd.f32 0.0, %v1435
        %v1437 = vpop.f32.mrf.mxu0
        %v1438 = vadd.f32 0.0, %v1437
        %1439 = vdwg.mxu0
        %1440 = vmatpush.bf16.msra.mxu0 %v1365
        %1441 = vmatpush.bf16.msra.mxu0 %v1361
        %1442 = vmatpush.bf16.msra.mxu0 %v1357
        %1443 = vmatpush.bf16.msra.mxu0 %v1353
        %1444 = vmatpush.bf16.msra.mxu0 %v1349
        %1445 = vmatpush.bf16.msra.mxu0 %v1345
        %1446 = vmatpush.bf16.msra.mxu0 %v1341
        %1447 = vmatpush.bf16.msra.mxu0 %v1337
        %1448 = vmatmul.bf16.gmra.mxu0 %v1205
        %v1449 = vpop.f32.mrf.mxu0
        %v1450 = vadd.f32 0.0, %v1449
        %v1451 = vpop.f32.mrf.mxu0
        %v1452 = vadd.f32 0.0, %v1451
        %1453 = vdwg.mxu0
        %v1454 = vadd.f32 %v1195, %v1408
        %v1455 = vadd.f32 %v1196, %v1422
        %v1456 = vadd.f32 %v1197, %v1436
        %v1457 = vadd.f32 %v1198, %v1450
        %v1458 = vadd.f32 %v1199, %v1410
        %v1459 = vadd.f32 %v1200, %v1424
        %v1460 = vadd.f32 %v1201, %v1438
        %v1461 = vadd.f32 %v1202, %v1452
        %v1462 = vxor.u32 %v1454, 2147483648
        %v1463 = vxor.u32 %v1458, 2147483648
        %v1464 = vmul.f32 %v1462, 1.442695
        %v1465 = vpow.pop %v1464
        %v1466 = vmul.f32 %v1463, 1.442695
        %v1467 = vpow.pop %v1466
        %v1468 = vadd.f32 %v1465, 1.0
        %v1469 = vadd.f32 %v1467, 1.0
        %v1470 = vrcp.pop %v1468
        %v1471 = vmul.f32 %v1468, %v1470
        %v1472 = vsub.f32 1.0, %v1471
        %v1473 = vmul.f32 %v1470, %v1472
        %v1474 = vadd.f32 %v1470, %v1473
        %vm1475 = vweird.f32 %v1468
        %vm1476 = vweird.f32 %v1470
        %vm1477 = vmor %vm1475, %vm1476
        %v1478 = vsel %vm1477, %v1470, %v1474
        %v1479 = vand.u32 2147483647, %v1468
        %vm1480 = vcmp.eq.f32.partialorder %v1479, 8.507059e+37
        %v1481 = vand.u32 %v1468, 2147483648
        %v1482 = vor.u32 1.1754944e-38, %v1481
        %v1483 = vsel %vm1480, %v1482, %v1478
        %v1484 = vmul.f32 1.0, %v1483
        %v1485 = vrcp.pop %v1469
        %v1486 = vmul.f32 %v1469, %v1485
        %v1487 = vsub.f32 1.0, %v1486
        %v1488 = vmul.f32 %v1485, %v1487
        %v1489 = vadd.f32 %v1485, %v1488
        %vm1490 = vweird.f32 %v1469
        %vm1491 = vweird.f32 %v1485
        %vm1492 = vmor %vm1490, %vm1491
        %v1493 = vsel %vm1492, %v1485, %v1489
        %v1494 = vand.u32 2147483647, %v1469
        %vm1495 = vcmp.eq.f32.partialorder %v1494, 8.507059e+37
        %v1496 = vand.u32 %v1469, 2147483648
        %v1497 = vor.u32 1.1754944e-38, %v1496
        %v1498 = vsel %vm1495, %v1497, %v1493
        %v1499 = vmul.f32 1.0, %v1498
        %v1500 = vxor.u32 %v1455, 2147483648
        %v1501 = vxor.u32 %v1459, 2147483648
        %v1502 = vmul.f32 %v1500, 1.442695
        %v1503 = vpow.pop %v1502
        %v1504 = vmul.f32 %v1501, 1.442695
        %v1505 = vpow.pop %v1504
        %v1506 = vadd.f32 %v1503, 1.0
        %v1507 = vadd.f32 %v1505, 1.0
        %v1508 = vrcp.pop %v1506
        %v1509 = vmul.f32 %v1506, %v1508
        %v1510 = vsub.f32 1.0, %v1509
        %v1511 = vmul.f32 %v1508, %v1510
        %v1512 = vadd.f32 %v1508, %v1511
        %vm1513 = vweird.f32 %v1506
        %vm1514 = vweird.f32 %v1508
        %vm1515 = vmor %vm1513, %vm1514
        %v1516 = vsel %vm1515, %v1508, %v1512
        %v1517 = vand.u32 2147483647, %v1506
        %vm1518 = vcmp.eq.f32.partialorder %v1517, 8.507059e+37
        %v1519 = vand.u32 %v1506, 2147483648
        %v1520 = vor.u32 1.1754944e-38, %v1519
        %v1521 = vsel %vm1518, %v1520, %v1516
        %v1522 = vmul.f32 1.0, %v1521
        %v1523 = vrcp.pop %v1507
        %v1524 = vmul.f32 %v1507, %v1523
        %v1525 = vsub.f32 1.0, %v1524
        %v1526 = vmul.f32 %v1523, %v1525
        %v1527 = vadd.f32 %v1523, %v1526
        %vm1528 = vweird.f32 %v1507
        %vm1529 = vweird.f32 %v1523
        %vm1530 = vmor %vm1528, %vm1529
        %v1531 = vsel %vm1530, %v1523, %v1527
        %v1532 = vand.u32 2147483647, %v1507
        %vm1533 = vcmp.eq.f32.partialorder %v1532, 8.507059e+37
        %v1534 = vand.u32 %v1507, 2147483648
        %v1535 = vor.u32 1.1754944e-38, %v1534
        %v1536 = vsel %vm1533, %v1535, %v1531
        %v1537 = vmul.f32 1.0, %v1536
        %v1538 = vtanh.pop %v1456
        %v1539 = vtanh.pop %v1460
        %v1540 = vxor.u32 %v1457, 2147483648
        %v1541 = vxor.u32 %v1461, 2147483648
        %v1542 = vmul.f32 %v1540, 1.442695
        %v1543 = vpow.pop %v1542
        %v1544 = vmul.f32 %v1541, 1.442695
        %v1545 = vpow.pop %v1544
        %v1546 = vadd.f32 %v1543, 1.0
        %v1547 = vadd.f32 %v1545, 1.0
        %v1548 = vrcp.pop %v1546
        %v1549 = vmul.f32 %v1546, %v1548
        %v1550 = vsub.f32 1.0, %v1549
        %v1551 = vmul.f32 %v1548, %v1550
        %v1552 = vadd.f32 %v1548, %v1551
        %vm1553 = vweird.f32 %v1546
        %vm1554 = vweird.f32 %v1548
        %vm1555 = vmor %vm1553, %vm1554
        %v1556 = vsel %vm1555, %v1548, %v1552
        %v1557 = vand.u32 2147483647, %v1546
        %vm1558 = vcmp.eq.f32.partialorder %v1557, 8.507059e+37
        %v1559 = vand.u32 %v1546, 2147483648
        %v1560 = vor.u32 1.1754944e-38, %v1559
        %v1561 = vsel %vm1558, %v1560, %v1556
        %v1562 = vmul.f32 1.0, %v1561
        %v1563 = vrcp.pop %v1547
        %v1564 = vmul.f32 %v1547, %v1563
        %v1565 = vsub.f32 1.0, %v1564
        %v1566 = vmul.f32 %v1563, %v1565
        %v1567 = vadd.f32 %v1563, %v1566
        %vm1568 = vweird.f32 %v1547
        %vm1569 = vweird.f32 %v1563
        %vm1570 = vmor %vm1568, %vm1569
        %v1571 = vsel %vm1570, %v1563, %v1567
        %v1572 = vand.u32 2147483647, %v1547
        %vm1573 = vcmp.eq.f32.partialorder %v1572, 8.507059e+37
        %v1574 = vand.u32 %v1547, 2147483648
        %v1575 = vor.u32 1.1754944e-38, %v1574
        %v1576 = vsel %vm1573, %v1575, %v1571
        %v1577 = vmul.f32 1.0, %v1576
        %v1578 = vld [vmem:[#allocation6] sm:$0xff]
        %v1579 = vld [vmem:[#allocation6 + $0x8] sm:$0xff]
        %v1580 = vmul.f32 %v1522, %v1578
        %v1581 = vmul.f32 %v1537, %v1579
        %v1582 = vmul.f32 %v1484, %v1538
        %v1583 = vmul.f32 %v1499, %v1539
        %v1584 = vadd.f32 %v1580, %v1582
        %v1585 = vadd.f32 %v1581, %v1583
        %v1586 = vtanh.pop %v1584
        %v1587 = vtanh.pop %v1585
        %v1588 = vmul.f32 %v1562, %v1586
        %v1589 = vmul.f32 %v1577, %v1587
        %v1590 = vpack.c.bf16 %v1588, %v1588
        %v1591 = vpack.c.bf16 %v1589, %v1589
        %s1592 = scalar_lea.vmem [#allocation3], 8
        %1593 = vst [vmem:[%s1592] sm:$0xf] %v1590
        %1594 = vst [vmem:[%s1592 + $0x4] sm:$0xf] %v1591
        %s1595 = sadd.s32 %s475, 1
        %p1596 = scmp.lt.s32.totalorder %s1595, 8
        // Predicated region
        $region85: #{tpu_custom_call.1} parent=59 // pred_check
          %p1597 = pneg %p1596
        $region86: #{tpu_custom_call.1} parent=59 // pred_check_branch
          %1599 = sbr.rel (%p1597) target = $region88
        $region87: #{tpu_custom_call.1} parent=59 // pred_region
          %1600 = vst [vmem:[#allocation5] sm:$0xff] %v1588
          %1601 = vst [vmem:[#allocation5 + $0x8] sm:$0xff] %v1589
          %1602 = vst [vmem:[#allocation6] sm:$0xff] %v1584
          %1603 = vst [vmem:[#allocation6 + $0x8] sm:$0xff] %v1585
        $region88: #{tpu_custom_call.1} parent=59 // pred_fallthru
          _
        %s1604 = smul.u32 4, 4
        %s1605 = smul.addr %s1604, 8
        %s1606 = scalar_lea.vmem [#allocation2], %s1605
        %v1607 = vld [vmem:[%s1606] sm:$0xff]
        %v1608 = vld [vmem:[%s1606 + $0x8] sm:$0xff]
        %v1609 = vld [vmem:[%s1606 + $0x10] sm:$0xff]
        %v1610 = vld [vmem:[%s1606 + $0x18] sm:$0xff]
        %v1611 = vld [vmem:[%s1606 + $0x20] sm:$0xff]
        %v1612 = vld [vmem:[%s1606 + $0x28] sm:$0xff]
        %v1613 = vld [vmem:[%s1606 + $0x30] sm:$0xff]
        %v1614 = vld [vmem:[%s1606 + $0x38] sm:$0xff]
        %v1615 = vld [vmem:[#allocation5] sm:$0xff]
        %v1616 = vld [vmem:[#allocation5 + $0x8] sm:$0xff]
        %v1617 = vpack.c.bf16 %v1616, %v1615
        %v1618 = vld [vmem:[#allocation13] sm:$0xff]
        %v1619 = vld [vmem:[#allocation13 + $0x8] sm:$0xff]
        %v1620 = vld [vmem:[#allocation13 + $0x10] sm:$0xff]
        %v1621 = vld [vmem:[#allocation13 + $0x18] sm:$0xff]
        %v1622 = vld [vmem:[#allocation13 + $0x20] sm:$0xff]
        %v1623 = vld [vmem:[#allocation13 + $0x28] sm:$0xff]
        %v1624 = vld [vmem:[#allocation13 + $0x30] sm:$0xff]
        %v1625 = vld [vmem:[#allocation13 + $0x38] sm:$0xff]
        %v1626 = vld [vmem:[#allocation13 + $0x40] sm:$0xff]
        %v1627 = vld [vmem:[#allocation13 + $0x48] sm:$0xff]
        %v1628 = vld [vmem:[#allocation13 + $0x50] sm:$0xff]
        %v1629 = vld [vmem:[#allocation13 + $0x58] sm:$0xff]
        %v1630 = vld [vmem:[#allocation13 + $0x60] sm:$0xff]
        %v1631 = vld [vmem:[#allocation13 + $0x68] sm:$0xff]
        %v1632 = vld [vmem:[#allocation13 + $0x70] sm:$0xff]
        %v1633 = vld [vmem:[#allocation13 + $0x78] sm:$0xff]
        %v1634 = vld [vmem:[#allocation13 + $0x80] sm:$0xff]
        %v1635 = vld [vmem:[#allocation13 + $0x88] sm:$0xff]
        %v1636 = vld [vmem:[#allocation13 + $0x90] sm:$0xff]
        %v1637 = vld [vmem:[#allocation13 + $0x98] sm:$0xff]
        %v1638 = vld [vmem:[#allocation13 + $0xa0] sm:$0xff]
        %v1639 = vld [vmem:[#allocation13 + $0xa8] sm:$0xff]
        %v1640 = vld [vmem:[#allocation13 + $0xb0] sm:$0xff]
        %v1641 = vld [vmem:[#allocation13 + $0xb8] sm:$0xff]
        %v1642 = vld [vmem:[#allocation13 + $0xc0] sm:$0xff]
        %v1643 = vld [vmem:[#allocation13 + $0xc8] sm:$0xff]
        %v1644 = vld [vmem:[#allocation13 + $0xd0] sm:$0xff]
        %v1645 = vld [vmem:[#allocation13 + $0xd8] sm:$0xff]
        %v1646 = vld [vmem:[#allocation13 + $0xe0] sm:$0xff]
        %v1647 = vld [vmem:[#allocation13 + $0xe8] sm:$0xff]
        %v1648 = vld [vmem:[#allocation13 + $0xf0] sm:$0xff]
        %v1649 = vld [vmem:[#allocation13 + $0xf8] sm:$0xff]
        %v1682 = vunpack.c.l.b16 %v1618
        %v1683 = vunpack.c.h.b16 %v1618
        %v1684 = vunpack.c.l.b16 %v1619
        %v1685 = vunpack.c.h.b16 %v1619
        %v1686 = vunpack.c.l.b16 %v1620
        %v1687 = vunpack.c.h.b16 %v1620
        %v1688 = vunpack.c.l.b16 %v1621
        %v1689 = vunpack.c.h.b16 %v1621
        %v1690 = vunpack.c.l.b16 %v1622
        %v1691 = vunpack.c.h.b16 %v1622
        %v1692 = vunpack.c.l.b16 %v1623
        %v1693 = vunpack.c.h.b16 %v1623
        %v1694 = vunpack.c.l.b16 %v1624
        %v1695 = vunpack.c.h.b16 %v1624
        %v1696 = vunpack.c.l.b16 %v1625
        %v1697 = vunpack.c.h.b16 %v1625
        %v1698 = vunpack.c.l.b16 %v1626
        %v1699 = vunpack.c.h.b16 %v1626
        %v1700 = vunpack.c.l.b16 %v1627
        %v1701 = vunpack.c.h.b16 %v1627
        %v1702 = vunpack.c.l.b16 %v1628
        %v1703 = vunpack.c.h.b16 %v1628
        %v1704 = vunpack.c.l.b16 %v1629
        %v1705 = vunpack.c.h.b16 %v1629
        %v1706 = vunpack.c.l.b16 %v1630
        %v1707 = vunpack.c.h.b16 %v1630
        %v1708 = vunpack.c.l.b16 %v1631
        %v1709 = vunpack.c.h.b16 %v1631
        %v1710 = vunpack.c.l.b16 %v1632
        %v1711 = vunpack.c.h.b16 %v1632
        %v1712 = vunpack.c.l.b16 %v1633
        %v1713 = vunpack.c.h.b16 %v1633
        %v1714 = vunpack.c.l.b16 %v1634
        %v1715 = vunpack.c.h.b16 %v1634
        %v1716 = vunpack.c.l.b16 %v1635
        %v1717 = vunpack.c.h.b16 %v1635
        %v1718 = vunpack.c.l.b16 %v1636
        %v1719 = vunpack.c.h.b16 %v1636
        %v1720 = vunpack.c.l.b16 %v1637
        %v1721 = vunpack.c.h.b16 %v1637
        %v1722 = vunpack.c.l.b16 %v1638
        %v1723 = vunpack.c.h.b16 %v1638
        %v1724 = vunpack.c.l.b16 %v1639
        %v1725 = vunpack.c.h.b16 %v1639
        %v1726 = vunpack.c.l.b16 %v1640
        %v1727 = vunpack.c.h.b16 %v1640
        %v1728 = vunpack.c.l.b16 %v1641
        %v1729 = vunpack.c.h.b16 %v1641
        %v1730 = vunpack.c.l.b16 %v1642
        %v1731 = vunpack.c.h.b16 %v1642
        %v1732 = vunpack.c.l.b16 %v1643
        %v1733 = vunpack.c.h.b16 %v1643
        %v1734 = vunpack.c.l.b16 %v1644
        %v1735 = vunpack.c.h.b16 %v1644
        %v1736 = vunpack.c.l.b16 %v1645
        %v1737 = vunpack.c.h.b16 %v1645
        %v1738 = vunpack.c.l.b16 %v1646
        %v1739 = vunpack.c.h.b16 %v1646
        %v1740 = vunpack.c.l.b16 %v1647
        %v1741 = vunpack.c.h.b16 %v1647
        %v1742 = vunpack.c.l.b16 %v1648
        %v1743 = vunpack.c.h.b16 %v1648
        %v1744 = vunpack.c.l.b16 %v1649
        %v1745 = vunpack.c.h.b16 %v1649
        %v1746 = vpack.c.b16 %v1686, %v1682
        %v1747 = vpack.c.b16 %v1687, %v1683
        %v1748 = vpack.c.b16 %v1688, %v1684
        %v1749 = vpack.c.b16 %v1689, %v1685
        %v1750 = vpack.c.b16 %v1694, %v1690
        %v1751 = vpack.c.b16 %v1695, %v1691
        %v1752 = vpack.c.b16 %v1696, %v1692
        %v1753 = vpack.c.b16 %v1697, %v1693
        %v1754 = vpack.c.b16 %v1702, %v1698
        %v1755 = vpack.c.b16 %v1703, %v1699
        %v1756 = vpack.c.b16 %v1704, %v1700
        %v1757 = vpack.c.b16 %v1705, %v1701
        %v1758 = vpack.c.b16 %v1710, %v1706
        %v1759 = vpack.c.b16 %v1711, %v1707
        %v1760 = vpack.c.b16 %v1712, %v1708
        %v1761 = vpack.c.b16 %v1713, %v1709
        %v1762 = vpack.c.b16 %v1718, %v1714
        %v1763 = vpack.c.b16 %v1719, %v1715
        %v1764 = vpack.c.b16 %v1720, %v1716
        %v1765 = vpack.c.b16 %v1721, %v1717
        %v1766 = vpack.c.b16 %v1726, %v1722
        %v1767 = vpack.c.b16 %v1727, %v1723
        %v1768 = vpack.c.b16 %v1728, %v1724
        %v1769 = vpack.c.b16 %v1729, %v1725
        %v1770 = vpack.c.b16 %v1734, %v1730
        %v1771 = vpack.c.b16 %v1735, %v1731
        %v1772 = vpack.c.b16 %v1736, %v1732
        %v1773 = vpack.c.b16 %v1737, %v1733
        %v1774 = vpack.c.b16 %v1742, %v1738
        %v1775 = vpack.c.b16 %v1743, %v1739
        %v1776 = vpack.c.b16 %v1744, %v1740
        %v1777 = vpack.c.b16 %v1745, %v1741
        %1810 = vmatpush.bf16.msra.mxu0 %v1774
        %1811 = vmatpush.bf16.msra.mxu0 %v1770
        %1812 = vmatpush.bf16.msra.mxu0 %v1766
        %1813 = vmatpush.bf16.msra.mxu0 %v1762
        %1814 = vmatpush.bf16.msra.mxu0 %v1758
        %1815 = vmatpush.bf16.msra.mxu0 %v1754
        %1816 = vmatpush.bf16.msra.mxu0 %v1750
        %1817 = vmatpush.bf16.msra.mxu0 %v1746
        %1818 = vmatmul.bf16.gmra.mxu0 %v1617
        %v1819 = vpop.f32.mrf.mxu0
        %v1820 = vadd.f32 0.0, %v1819
        %v1821 = vpop.f32.mrf.mxu0
        %v1822 = vadd.f32 0.0, %v1821
        %1823 = vdwg.mxu0
        %1824 = vmatpush.bf16.msra.mxu0 %v1775
        %1825 = vmatpush.bf16.msra.mxu0 %v1771
        %1826 = vmatpush.bf16.msra.mxu0 %v1767
        %1827 = vmatpush.bf16.msra.mxu0 %v1763
        %1828 = vmatpush.bf16.msra.mxu0 %v1759
        %1829 = vmatpush.bf16.msra.mxu0 %v1755
        %1830 = vmatpush.bf16.msra.mxu0 %v1751
        %1831 = vmatpush.bf16.msra.mxu0 %v1747
        %1832 = vmatmul.bf16.gmra.mxu0 %v1617
        %v1833 = vpop.f32.mrf.mxu0
        %v1834 = vadd.f32 0.0, %v1833
        %v1835 = vpop.f32.mrf.mxu0
        %v1836 = vadd.f32 0.0, %v1835
        %1837 = vdwg.mxu0
        %1838 = vmatpush.bf16.msra.mxu0 %v1776
        %1839 = vmatpush.bf16.msra.mxu0 %v1772
        %1840 = vmatpush.bf16.msra.mxu0 %v1768
        %1841 = vmatpush.bf16.msra.mxu0 %v1764
        %1842 = vmatpush.bf16.msra.mxu0 %v1760
        %1843 = vmatpush.bf16.msra.mxu0 %v1756
        %1844 = vmatpush.bf16.msra.mxu0 %v1752
        %1845 = vmatpush.bf16.msra.mxu0 %v1748
        %1846 = vmatmul.bf16.gmra.mxu0 %v1617
        %v1847 = vpop.f32.mrf.mxu0
        %v1848 = vadd.f32 0.0, %v1847
        %v1849 = vpop.f32.mrf.mxu0
        %v1850 = vadd.f32 0.0, %v1849
        %1851 = vdwg.mxu0
        %1852 = vmatpush.bf16.msra.mxu0 %v1777
        %1853 = vmatpush.bf16.msra.mxu0 %v1773
        %1854 = vmatpush.bf16.msra.mxu0 %v1769
        %1855 = vmatpush.bf16.msra.mxu0 %v1765
        %1856 = vmatpush.bf16.msra.mxu0 %v1761
        %1857 = vmatpush.bf16.msra.mxu0 %v1757
        %1858 = vmatpush.bf16.msra.mxu0 %v1753
        %1859 = vmatpush.bf16.msra.mxu0 %v1749
        %1860 = vmatmul.bf16.gmra.mxu0 %v1617
        %v1861 = vpop.f32.mrf.mxu0
        %v1862 = vadd.f32 0.0, %v1861
        %v1863 = vpop.f32.mrf.mxu0
        %v1864 = vadd.f32 0.0, %v1863
        %1865 = vdwg.mxu0
        %v1866 = vadd.f32 %v1607, %v1820
        %v1867 = vadd.f32 %v1608, %v1834
        %v1868 = vadd.f32 %v1609, %v1848
        %v1869 = vadd.f32 %v1610, %v1862
        %v1870 = vadd.f32 %v1611, %v1822
        %v1871 = vadd.f32 %v1612, %v1836
        %v1872 = vadd.f32 %v1613, %v1850
        %v1873 = vadd.f32 %v1614, %v1864
        %v1874 = vxor.u32 %v1866, 2147483648
        %v1875 = vxor.u32 %v1870, 2147483648
        %v1876 = vmul.f32 %v1874, 1.442695
        %v1877 = vpow.pop %v1876
        %v1878 = vmul.f32 %v1875, 1.442695
        %v1879 = vpow.pop %v1878
        %v1880 = vadd.f32 %v1877, 1.0
        %v1881 = vadd.f32 %v1879, 1.0
        %v1882 = vrcp.pop %v1880
        %v1883 = vmul.f32 %v1880, %v1882
        %v1884 = vsub.f32 1.0, %v1883
        %v1885 = vmul.f32 %v1882, %v1884
        %v1886 = vadd.f32 %v1882, %v1885
        %vm1887 = vweird.f32 %v1880
        %vm1888 = vweird.f32 %v1882
        %vm1889 = vmor %vm1887, %vm1888
        %v1890 = vsel %vm1889, %v1882, %v1886
        %v1891 = vand.u32 2147483647, %v1880
        %vm1892 = vcmp.eq.f32.partialorder %v1891, 8.507059e+37
        %v1893 = vand.u32 %v1880, 2147483648
        %v1894 = vor.u32 1.1754944e-38, %v1893
        %v1895 = vsel %vm1892, %v1894, %v1890
        %v1896 = vmul.f32 1.0, %v1895
        %v1897 = vrcp.pop %v1881
        %v1898 = vmul.f32 %v1881, %v1897
        %v1899 = vsub.f32 1.0, %v1898
        %v1900 = vmul.f32 %v1897, %v1899
        %v1901 = vadd.f32 %v1897, %v1900
        %vm1902 = vweird.f32 %v1881
        %vm1903 = vweird.f32 %v1897
        %vm1904 = vmor %vm1902, %vm1903
        %v1905 = vsel %vm1904, %v1897, %v1901
        %v1906 = vand.u32 2147483647, %v1881
        %vm1907 = vcmp.eq.f32.partialorder %v1906, 8.507059e+37
        %v1908 = vand.u32 %v1881, 2147483648
        %v1909 = vor.u32 1.1754944e-38, %v1908
        %v1910 = vsel %vm1907, %v1909, %v1905
        %v1911 = vmul.f32 1.0, %v1910
        %v1912 = vxor.u32 %v1867, 2147483648
        %v1913 = vxor.u32 %v1871, 2147483648
        %v1914 = vmul.f32 %v1912, 1.442695
        %v1915 = vpow.pop %v1914
        %v1916 = vmul.f32 %v1913, 1.442695
        %v1917 = vpow.pop %v1916
        %v1918 = vadd.f32 %v1915, 1.0
        %v1919 = vadd.f32 %v1917, 1.0
        %v1920 = vrcp.pop %v1918
        %v1921 = vmul.f32 %v1918, %v1920
        %v1922 = vsub.f32 1.0, %v1921
        %v1923 = vmul.f32 %v1920, %v1922
        %v1924 = vadd.f32 %v1920, %v1923
        %vm1925 = vweird.f32 %v1918
        %vm1926 = vweird.f32 %v1920
        %vm1927 = vmor %vm1925, %vm1926
        %v1928 = vsel %vm1927, %v1920, %v1924
        %v1929 = vand.u32 2147483647, %v1918
        %vm1930 = vcmp.eq.f32.partialorder %v1929, 8.507059e+37
        %v1931 = vand.u32 %v1918, 2147483648
        %v1932 = vor.u32 1.1754944e-38, %v1931
        %v1933 = vsel %vm1930, %v1932, %v1928
        %v1934 = vmul.f32 1.0, %v1933
        %v1935 = vrcp.pop %v1919
        %v1936 = vmul.f32 %v1919, %v1935
        %v1937 = vsub.f32 1.0, %v1936
        %v1938 = vmul.f32 %v1935, %v1937
        %v1939 = vadd.f32 %v1935, %v1938
        %vm1940 = vweird.f32 %v1919
        %vm1941 = vweird.f32 %v1935
        %vm1942 = vmor %vm1940, %vm1941
        %v1943 = vsel %vm1942, %v1935, %v1939
        %v1944 = vand.u32 2147483647, %v1919
        %vm1945 = vcmp.eq.f32.partialorder %v1944, 8.507059e+37
        %v1946 = vand.u32 %v1919, 2147483648
        %v1947 = vor.u32 1.1754944e-38, %v1946
        %v1948 = vsel %vm1945, %v1947, %v1943
        %v1949 = vmul.f32 1.0, %v1948
        %v1950 = vtanh.pop %v1868
        %v1951 = vtanh.pop %v1872
        %v1952 = vxor.u32 %v1869, 2147483648
        %v1953 = vxor.u32 %v1873, 2147483648
        %v1954 = vmul.f32 %v1952, 1.442695
        %v1955 = vpow.pop %v1954
        %v1956 = vmul.f32 %v1953, 1.442695
        %v1957 = vpow.pop %v1956
        %v1958 = vadd.f32 %v1955, 1.0
        %v1959 = vadd.f32 %v1957, 1.0
        %v1960 = vrcp.pop %v1958
        %v1961 = vmul.f32 %v1958, %v1960
        %v1962 = vsub.f32 1.0, %v1961
        %v1963 = vmul.f32 %v1960, %v1962
        %v1964 = vadd.f32 %v1960, %v1963
        %vm1965 = vweird.f32 %v1958
        %vm1966 = vweird.f32 %v1960
        %vm1967 = vmor %vm1965, %vm1966
        %v1968 = vsel %vm1967, %v1960, %v1964
        %v1969 = vand.u32 2147483647, %v1958
        %vm1970 = vcmp.eq.f32.partialorder %v1969, 8.507059e+37
        %v1971 = vand.u32 %v1958, 2147483648
        %v1972 = vor.u32 1.1754944e-38, %v1971
        %v1973 = vsel %vm1970, %v1972, %v1968
        %v1974 = vmul.f32 1.0, %v1973
        %v1975 = vrcp.pop %v1959
        %v1976 = vmul.f32 %v1959, %v1975
        %v1977 = vsub.f32 1.0, %v1976
        %v1978 = vmul.f32 %v1975, %v1977
        %v1979 = vadd.f32 %v1975, %v1978
        %vm1980 = vweird.f32 %v1959
        %vm1981 = vweird.f32 %v1975
        %vm1982 = vmor %vm1980, %vm1981
        %v1983 = vsel %vm1982, %v1975, %v1979
        %v1984 = vand.u32 2147483647, %v1959
        %vm1985 = vcmp.eq.f32.partialorder %v1984, 8.507059e+37
        %v1986 = vand.u32 %v1959, 2147483648
        %v1987 = vor.u32 1.1754944e-38, %v1986
        %v1988 = vsel %vm1985, %v1987, %v1983
        %v1989 = vmul.f32 1.0, %v1988
        %v1990 = vld [vmem:[#allocation6] sm:$0xff]
        %v1991 = vld [vmem:[#allocation6 + $0x8] sm:$0xff]
        %v1992 = vmul.f32 %v1934, %v1990
        %v1993 = vmul.f32 %v1949, %v1991
        %v1994 = vmul.f32 %v1896, %v1950
        %v1995 = vmul.f32 %v1911, %v1951
        %v1996 = vadd.f32 %v1992, %v1994
        %v1997 = vadd.f32 %v1993, %v1995
        %v1998 = vtanh.pop %v1996
        %v1999 = vtanh.pop %v1997
        %v2000 = vmul.f32 %v1974, %v1998
        %v2001 = vmul.f32 %v1989, %v1999
        %v2002 = vpack.c.bf16 %v2000, %v2000
        %v2003 = vpack.c.bf16 %v2001, %v2001
        %s2004 = scalar_lea.vmem [#allocation3], 16
        %2005 = vst [vmem:[%s2004] sm:$0xf] %v2002
        %2006 = vst [vmem:[%s2004 + $0x4] sm:$0xf] %v2003
        %s2007 = sadd.s32 %s475, 2
        %p2008 = scmp.lt.s32.totalorder %s2007, 8
        // Predicated region
        $region89: #{tpu_custom_call.1} parent=59 // pred_check
          %p2009 = pneg %p2008
        $region90: #{tpu_custom_call.1} parent=59 // pred_check_branch
          %2011 = sbr.rel (%p2009) target = $region92
        $region91: #{tpu_custom_call.1} parent=59 // pred_region
          %2012 = vst [vmem:[#allocation5] sm:$0xff] %v2000
          %2013 = vst [vmem:[#allocation5 + $0x8] sm:$0xff] %v2001
          %2014 = vst [vmem:[#allocation6] sm:$0xff] %v1996
          %2015 = vst [vmem:[#allocation6 + $0x8] sm:$0xff] %v1997
        $region92: #{tpu_custom_call.1} parent=59 // pred_fallthru
          _
        %v2016 = vld [vmem:[#allocation3] sm:$0xf]
        %v2017 = vld [vmem:[#allocation3 + $0x4] sm:$0xf]
        %v2018 = vld [vmem:[#allocation3 + $0x8] sm:$0xf]
        %v2019 = vld [vmem:[#allocation3 + $0xc] sm:$0xf]
        %v2020 = vld [vmem:[#allocation3 + $0x10] sm:$0xf]
        %v2021 = vld [vmem:[#allocation3 + $0x14] sm:$0xf]
        %v2022 = vld [vmem:[%s8] sm:$0xf]
        %v2023 = vld [vmem:[%s8 + $0x4] sm:$0xf]
        %v2024 = vld [vmem:[%s8 + $0x8] sm:$0xf]
        %v2025 = vld [vmem:[%s8 + $0xc] sm:$0xf]
        %v2026 = vld [vmem:[%s8 + $0x10] sm:$0xf]
        %v2027 = vld [vmem:[%s8 + $0x14] sm:$0xf]
        %v2028 = vld [vmem:[%s8 + $0x18] sm:$0xf]
        %v2029 = vld [vmem:[%s8 + $0x1c] sm:$0xf]
        %v2030 = vld [vmem:[%s8 + $0x20] sm:$0xf]
        %v2031 = vld [vmem:[%s8 + $0x24] sm:$0xf]
        %v2032 = vld [vmem:[%s8 + $0x28] sm:$0xf]
        %v2033 = vld [vmem:[%s8 + $0x2c] sm:$0xf]
        %v2034 = vld [vmem:[%s8 + $0x30] sm:$0xf]
        %v2035 = vld [vmem:[%s8 + $0x34] sm:$0xf]
        %v2036 = vld [vmem:[%s8 + $0x38] sm:$0xf]
        %v2037 = vld [vmem:[%s8 + $0x3c] sm:$0xf]
        %v2038 = vld [vmem:[%s9] sm:$0x1]
        %v2040 = vperm.slane %v2038, 0
        %v2048 = vunpack.c.l.b16 %v2016
        %v2049 = vunpack.c.l.b16 %v2017
        %v2050 = vunpack.c.l.b16 %v2018
        %v2051 = vunpack.c.l.b16 %v2019
        %v2052 = vunpack.c.l.b16 %v2020
        %v2053 = vunpack.c.l.b16 %v2021
        %v2054 = vpack.c.b16 %v2049, %v2048
        %v2055 = vpack.c.b16 %v2051, %v2050
        %v2056 = vpack.c.b16 %v2053, %v2052
        %v2076 = vunpack.c.l.b16 %v2022
        %v2077 = vunpack.c.l.b16 %v2023
        %v2078 = vunpack.c.l.b16 %v2024
        %v2079 = vunpack.c.l.b16 %v2025
        %v2080 = vunpack.c.l.b16 %v2026
        %v2081 = vunpack.c.l.b16 %v2027
        %v2082 = vunpack.c.l.b16 %v2028
        %v2083 = vunpack.c.l.b16 %v2029
        %v2084 = vunpack.c.l.b16 %v2030
        %v2085 = vunpack.c.l.b16 %v2031
        %v2086 = vunpack.c.l.b16 %v2032
        %v2087 = vunpack.c.l.b16 %v2033
        %v2088 = vunpack.c.l.b16 %v2034
        %v2089 = vunpack.c.l.b16 %v2035
        %v2090 = vunpack.c.l.b16 %v2036
        %v2091 = vunpack.c.l.b16 %v2037
        %v2092 = vpack.c.b16 %v2077, %v2076
        %v2093 = vpack.c.b16 %v2079, %v2078
        %v2094 = vpack.c.b16 %v2081, %v2080
        %v2095 = vpack.c.b16 %v2083, %v2082
        %v2096 = vpack.c.b16 %v2085, %v2084
        %v2097 = vpack.c.b16 %v2087, %v2086
        %v2098 = vpack.c.b16 %v2089, %v2088
        %v2099 = vpack.c.b16 %v2091, %v2090
        %2108 = vmatpush.bf16.msra.mxu0 %v2099
        %2109 = vmatpush.bf16.msra.mxu0 %v2098
        %2110 = vmatpush.bf16.msra.mxu0 %v2097
        %2111 = vmatpush.bf16.msra.mxu0 %v2096
        %2112 = vmatpush.bf16.msra.mxu0 %v2095
        %2113 = vmatpush.bf16.msra.mxu0 %v2094
        %2114 = vmatpush.bf16.msra.mxu0 %v2093
        %2115 = vmatpush.bf16.msra.mxu0 %v2092
        %2116 = vmatmul.bf16.gmra.mxu0 %v2054
        %v2117 = vpop.f32.mrf.mxu0
        %v2118 = vadd.f32 %v2040, %v2117
        %v2119 = vpop.f32.mrf.mxu0
        %v2120 = vadd.f32 %v2040, %v2119
        %2121 = vmatmul.bf16.gmra.mxu0 %v2055
        %v2122 = vpop.f32.mrf.mxu0
        %v2123 = vadd.f32 %v2040, %v2122
        %v2124 = vpop.f32.mrf.mxu0
        %v2125 = vadd.f32 %v2040, %v2124
        %2126 = vmatmul.bf16.gmra.mxu0 %v2056
        %v2127 = vpop.f32.mrf.mxu0
        %v2128 = vadd.f32 %v2040, %v2127
        %v2129 = vpop.f32.mrf.mxu0
        %v2130 = vadd.f32 %v2040, %v2129
        %2131 = vdwg.mxu0
        %2132 = vst [vmem:[%s462] sm:$0xff] %v2118
        %2133 = vst [vmem:[%s462 + $0x8] sm:$0xff] %v2120
        %2134 = vst [vmem:[%s462 + $0x10] sm:$0xff] %v2123
        %2135 = vst [vmem:[%s462 + $0x18] sm:$0xff] %v2125
        %2136 = vst [vmem:[%s462 + $0x20] sm:$0xff] %v2128
        %2137 = vst [vmem:[%s462 + $0x28] sm:$0xff] %v2130
        %v2138 = vld [vmem:[#allocation5] sm:$0xff]
        %v2139 = vld [vmem:[#allocation5 + $0x8] sm:$0xff]
        %2140 = vst [vmem:[#allocation16] sm:$0xff] %v2138
        %2141 = vst [vmem:[#allocation16 + $0x8] sm:$0xff] %v2139
        %v2142 = vld [vmem:[#allocation6] sm:$0xff]
        %v2143 = vld [vmem:[#allocation6 + $0x8] sm:$0xff]
        %2144 = vst [vmem:[#allocation18] sm:$0xff] %v2142
        %2145 = vst [vmem:[#allocation18 + $0x8] sm:$0xff] %v2143
        %s2146 = sand.u32 %s254, 1
        %s2147 = scalar_lea.sflag [#allocation9], %s2146
        %s2148 = sand.u32 %s254, 1
        %s2149 = smul.addr %s2148, 48
        %s2150 = scalar_lea.vmem [#allocation15], %s2149
        // Predicated region
        $region93: #{tpu_custom_call.1} parent=59 // pred_check
          %p2151 = pneg %p264
        $region94: #{tpu_custom_call.1} parent=59 // pred_check_branch
          %2153 = sbr.rel (%p2151) target = $region96
        $region95: #{tpu_custom_call.1} parent=59 // pred_region
          %s2154 = smul.u32 6, %s31
          %2156 = vsyncadd %s2147, 0
          %s2157 = smul.addr %s2154, 8
          %s2158 = scalar_lea.hbm %s10, %s2157
          %s2159 = sshll.u32 %s2150, 4
          %s2160 = int_to_ptr.vmem [resolvable:$true] %s2159
          %s2161 = sshll.u32 %s2158, 4
          %s2162 = int_to_ptr.hbm [resolvable:$true] %s2161
          %2167 = dma.vmem_to_hbm [thread:$0]  %s2160, 768, %s2162, %s2147, 128, 128, 8
        $region96: #{tpu_custom_call.1} parent=59 // pred_fallthru
          _
        // Predicated region
        $region97: #{tpu_custom_call.1} parent=59 // pred_check
          %p2168 = pneg %p285
        $region98: #{tpu_custom_call.1} parent=59 // pred_check_branch
          %2170 = sbr.rel (%p2168) target = $region100
        $region99: #{tpu_custom_call.1} parent=59 // pred_region
          %2172 = vsyncadd [#allocation17], 0
          %s2173 = sshll.u32 [#allocation16], 4
          %s2174 = int_to_ptr.vmem [resolvable:$true] %s2173
          %s2175 = sshll.u32 %s11, 4
          %s2176 = int_to_ptr.hbm [resolvable:$true] %s2175
          %2181 = dma.vmem_to_hbm [thread:$0]  %s2174, 256, %s2176, [#allocation17], 128, 128, 8
        $region100: #{tpu_custom_call.1} parent=59 // pred_fallthru
          _
        // Predicated region
        $region101: #{tpu_custom_call.1} parent=59 // pred_check
          %p2182 = pneg %p306
        $region102: #{tpu_custom_call.1} parent=59 // pred_check_branch
          %2184 = sbr.rel (%p2182) target = $region104
        $region103: #{tpu_custom_call.1} parent=59 // pred_region
          %2186 = vsyncadd [#allocation17], 0
          %s2187 = sshll.u32 [#allocation18], 4
          %s2188 = int_to_ptr.vmem [resolvable:$true] %s2187
          %s2189 = sshll.u32 %s12, 4
          %s2190 = int_to_ptr.hbm [resolvable:$true] %s2189
          %2195 = dma.vmem_to_hbm [thread:$0]  %s2188, 256, %s2190, [#allocation17], 128, 128, 8
        $region104: #{tpu_custom_call.1} parent=59 // pred_fallthru
          _
        // Predicated region
        $region105: #{tpu_custom_call.1} parent=59 // pred_check
          %p2196 = pneg %p285
        $region106: #{tpu_custom_call.1} parent=59 // pred_check_branch
          %2198 = sbr.rel (%p2196) target = $region108
        $region107: #{tpu_custom_call.1} parent=59 // pred_region
          %2200 = dma.done [#allocation17], 256
        $region108: #{tpu_custom_call.1} parent=59 // pred_fallthru
          _
        // Predicated region
        $region109: #{tpu_custom_call.1} parent=59 // pred_check
          %p2201 = pneg %p306
        $region110: #{tpu_custom_call.1} parent=59 // pred_check_branch
          %2203 = sbr.rel (%p2201) target = $region112
        $region111: #{tpu_custom_call.1} parent=59 // pred_region
          %2205 = dma.done [#allocation17], 256
        $region112: #{tpu_custom_call.1} parent=59 // pred_fallthru
          _
      $region60: #{tpu_custom_call.1} parent=5 // pred_fallthru
        _
      %p2206 = scmp.le.s32.totalorder 2, %s26
      // Predicated region
      $region113: #{tpu_custom_call.1} parent=5 // pred_check
        %p2207 = pneg %p2206
      $region114: #{tpu_custom_call.1} parent=5 // pred_check_branch
        %2209 = sbr.rel (%p2207) target = $region116
      $region115: #{tpu_custom_call.1} parent=5 // pred_region
        %s2210 = ssub.s32 %s26, 2
        // Predicated region
        $region117: #{tpu_custom_call.1} parent=115 // pred_check
          %p2211 = pneg %p270
        $region118: #{tpu_custom_call.1} parent=115 // pred_check_branch
          %2213 = sbr.rel (%p2211) target = $region120
        $region119: #{tpu_custom_call.1} parent=115 // pred_region
          %s2214 = sand.u32 %s255, 1
          %s2215 = scalar_lea.sflag [#allocation9], %s2214
          %s2216 = sand.u32 %s255, 1
          %s2217 = smul.addr %s2216, 48
          %s2218 = scalar_lea.vmem [#allocation15], %s2217
          %2220 = dma.done %s2215, 768
        $region120: #{tpu_custom_call.1} parent=115 // pred_fallthru
          _
      $region116: #{tpu_custom_call.1} parent=5 // pred_fallthru
        _
    $region6: #{tpu_custom_call.1} parent=1 // loop_footer
      %s30 = sadd.s32 1, %s26
    $region7: #{tpu_custom_call.1} parent=1 // loop_footer_branch
      %25 = sbr.rel target = $region3
    $region8: #{tpu_custom_call.1} parent=1 // loop_exit
      _
    %2221 = vsyncpa [#allocation8], 1
    %s2222 = scalar_lea.sflag [#allocation8], 1
    %2223 = vsyncpa %s2222, 1
    %2224 = vsyncpa [#allocation11], 1
    %2225 = vsyncpa [#allocation14], 1
    %2226 = vsyncpa [#allocation9], 1
    %s2227 = scalar_lea.sflag [#allocation9], 1
    %2228 = vsyncpa %s2227, 1
    %2229 = vsyncpa [#allocation17], 1

</llo_original>
